<compile_context>
chip_gen: v7x
topology: tpu7x:2x2x1
jax: 0.10.0
libtpu: 0.0.40
codegen_flags: <defaults>
</compile_context>

<pallas_src>
import jax
import jax.numpy as jnp
from jax.experimental import pallas as pl
from jax.experimental.pallas import tpu as pltpu

_LANE = 128          # output tile must be a multiple of the 128-lane width
_TE_MAX = 2048       # max edge rows per grid step (VMEM use stays tiny)
_TARGET_STEPS = 8    # keep >= ~8 grid steps for large E (v7x 2-TC occupancy)


def _round_up(x, m):
    return ((x + m - 1) // m) * m


def _choose_tile(n_edges):
    """Edge rows per grid step: big enough to amortize ~0.35us/step overhead,
    small enough that large edge lists still give several 'parallel' steps."""
    te = _round_up(max(1, -(-n_edges // _TARGET_STEPS)), _LANE)
    return max(_LANE, min(_TE_MAX, te))


def _edge_score_kernel(src_ref, dst_ref, wt_ref, out_ref):
    # proj = src @ W^T ; wt_ref already holds W^T (transposed once in the
    # wrapper -> no per-iteration transpose of the replicated weight block).
    proj = jnp.dot(src_ref[...], wt_ref[...], preferred_element_type=jnp.float32)
    # Per-edge dot product <proj_i, dst_i>  (== torch.einsum('ij,ij->i')).
    score = jnp.sum(proj * dst_ref[...], axis=-1)          # (TE,)
    # Lane-dense store: output block is (1, TE) -> full unmasked lane writes.
    out_ref[0, :] = score


def _edge_score_padded(src_feat, dst_feat, weight, te):
    """Scores for pre-gathered, pre-padded edge rows. Returns flat (E_pad,)."""
    e_pad, din = src_feat.shape
    dout = dst_feat.shape[1]
    assert weight.shape == (dout, din)
    assert e_pad % te == 0

    wt = weight.T.astype(jnp.float32)                       # (Din, Dout), once
    cost = pl.CostEstimate(
        flops=2 * e_pad * din * dout + 2 * e_pad * dout,
        transcendentals=0,
        bytes_accessed=4 * (e_pad * (din + dout + 1) + din * dout),
    )
    out = pl.pallas_call(
        _edge_score_kernel,
        out_shape=jax.ShapeDtypeStruct((1, e_pad), jnp.float32),
        grid_spec=pltpu.PrefetchScalarGridSpec(
            num_scalar_prefetch=0,
            grid=(e_pad // te,),
            in_specs=[
                pl.BlockSpec((te, din), lambda i: (i, 0)),
                pl.BlockSpec((te, dout), lambda i: (i, 0)),
                pl.BlockSpec((din, dout), lambda i: (0, 0)),  # weight replicated
            ],
            out_specs=pl.BlockSpec((1, te), lambda i: (0, i)),
        ),
        compiler_params=pltpu.CompilerParams(dimension_semantics=("parallel",)),
        cost_estimate=cost,
    )(src_feat.astype(jnp.float32), dst_feat.astype(jnp.float32), wt)
    return out[0]


def _edge_score_gather(src_tbl, dst_tbl, src_idx, dst_idx, weight):
    """score_e = <W(src_tbl[src_idx_e]), dst_tbl[dst_idx_e]> for every edge e."""
    e = src_idx.shape[0]
    te = _choose_tile(e)
    e_pad = _round_up(e, te)
    pad = e_pad - e
    if pad:
        # Pad the index arrays (with node 0) instead of scattering gathered
        # rows into a zeros buffer: a single gather, no full-array rewrite.
        src_idx = jnp.pad(src_idx, (0, pad))
        dst_idx = jnp.pad(dst_idx, (0, pad))
    return _edge_score_padded(src_tbl[src_idx], dst_tbl[dst_idx], weight, te)[:e]


def decagon_decoder_forward(params, drug_h, protein_h, edges):
    """Reproduces DecagonDecoder.forward.

    params: dict with 'ppi_w' (Dp,Dp), 'ddi_w' (Dd,Dd), 'dpi_w' (Dp,Dd),
            'ddi_cse' {etype: (1, Dd)}
    edges:  dict etype -> (src_idx, dst_idx)
            'ppi': protein->protein, 'dpi': drug->protein, 'pdi': protein->drug,
            ddi etypes: drug->drug
    returns dict etype -> (E,) scores
    """
    scores = {}

    # --- PPI: <W_ppi(protein[s]), protein[d]> -------------------------------
    s, d = edges["ppi"]
    scores["ppi"] = _edge_score_gather(protein_h, protein_h, s, d, params["ppi_w"])

    # --- DPI + PDI share dpi_w and operand shapes: one batched launch. -------
    # dpi: <W_dpi(drug[s]), protein[d]>;  pdi: <protein[s], W_dpi(drug[d])>
    s_dpi, d_dpi = edges["dpi"]
    s_pdi, d_pdi = edges["pdi"]
    n_dpi, n_pdi = int(s_dpi.shape[0]), int(s_pdi.shape[0])
    drug_idx = jnp.concatenate([s_dpi, d_pdi])   # rows run through dpi_w
    prot_idx = jnp.concatenate([d_dpi, s_pdi])   # rows dotted against
    both = _edge_score_gather(drug_h, protein_h, drug_idx, prot_idx, params["dpi_w"])
    scores["dpi"] = both[:n_dpi]
    scores["pdi"] = both[n_dpi:n_dpi + n_pdi]

    # --- DDI: all side-effect etypes batched into ONE launch. ----------------
    # score = <W_ddi(c ⊙ drug[s]), c ⊙ drug[d]> with c the per-etype cse weight.
    etypes = list(params["ddi_cse"].keys())
    if etypes:
        counts = [int(edges[et][0].shape[0]) for et in etypes]
        cse_tbl = jnp.concatenate([params["ddi_cse"][et] for et in etypes], axis=0)
        src_idx = jnp.concatenate([edges[et][0] for et in etypes])
        dst_idx = jnp.concatenate([edges[et][1] for et in etypes])
        eids = jnp.concatenate(
            [jnp.full((n,), i, jnp.int32) for i, n in enumerate(counts)])

        e_total = int(src_idx.shape[0])
        te = _choose_tile(e_total)
        e_pad = _round_up(e_total, te)
        pad = e_pad - e_total
        if pad:
            src_idx = jnp.pad(src_idx, (0, pad))
            dst_idx = jnp.pad(dst_idx, (0, pad))
            eids = jnp.pad(eids, (0, pad))

        # One gather + one cse-table lookup + one multiply per operand (XLA
        # fuses the gather with the scale under jit) instead of a per-etype
        # loop of gather/scale/concat ops.
        scale = cse_tbl[eids]                     # (E_pad, Dd)
        src_all = drug_h[src_idx] * scale
        dst_all = drug_h[dst_idx] * scale
        flat = _edge_score_padded(src_all, dst_all, params["ddi_w"], te)
        off = 0
        for et, n in zip(etypes, counts):
            scores[et] = flat[off:off + n]
            off += n

    return scores


def _reference(params, drug_h, protein_h, edges):
    def score(src, dst, w):
        return jnp.einsum("ij,ij->i", src @ w.T, dst)

    out = {}
    s, d = edges["ppi"]
    out["ppi"] = score(protein_h[s], protein_h[d], params["ppi_w"])
    s, d = edges["dpi"]
    out["dpi"] = score(drug_h[s], protein_h[d], params["dpi_w"])
    s, d = edges["pdi"]
    out["pdi"] = jnp.einsum("ij,ij->i", protein_h[s], drug_h[d] @ params["dpi_w"].T)
    for etype, cse_w in params["ddi_cse"].items():
        scaled = drug_h * cse_w
        s, d = edges[etype]
        out[etype] = score(scaled[s], scaled[d], params["ddi_w"])
    return out


if __name__ == "__main__":
    key = jax.random.PRNGKey(0)
    Dd, Dp = 32, 16          # drug_in_dim, protein_in_dim
    Nd, Np = 12, 20          # num drug / protein nodes
    ddi_etypes = ["ddi_side_effect_0", "ddi_side_effect_1", "ddi_side_effect_2"]

    ks = jax.random.split(key, 16)
    drug_h = jax.random.normal(ks[0], (Nd, Dd), jnp.float32)
    protein_h = jax.random.normal(ks[1], (Np, Dp), jnp.float32)

    # Deterministic "kaiming-ish" uniform init for weights (no checkpoint load).
    def init_w(k, shape, fan_in):
        bound = (6.0 / fan_in) ** 0.5
        return jax.random.uniform(k, shape, jnp.float32, -bound, bound)

    params = {
        "ppi_w": init_w(ks[2], (Dp, Dp), Dp),
        "ddi_w": init_w(ks[3], (Dd, Dd), Dd),
        "dpi_w": init_w(ks[4], (Dp, Dd), Dd),
        "ddi_cse": {
            et: init_w(ks[5 + i], (1, Dd), Dd) for i, et in enumerate(ddi_etypes)
        },
    }

    # Synthetic edge lists (src_idx, dst_idx) per canonical edge type.
    # ppi gets 300 edges so the multi-block grid path (grid > 1) is exercised.
    edges = {
        "ppi": (jax.random.randint(ks[9], (300,), 0, Np),
                jax.random.randint(ks[10], (300,), 0, Np)),
        "dpi": (jax.random.randint(ks[11], (7,), 0, Nd),
                jax.random.randint(ks[12], (7,), 0, Np)),
        "pdi": (jax.random.randint(ks[13], (9,), 0, Np),
                jax.random.randint(ks[14], (9,), 0, Nd)),
    }
    for i, et in enumerate(ddi_etypes):
        ke = jax.random.fold_in(ks[15], i)
        k1, k2 = jax.random.split(ke)
        edges[et] = (jax.random.randint(k1, (6,), 0, Nd),
                     jax.random.randint(k2, (6,), 0, Nd))

    forward = jax.jit(decagon_decoder_forward)
    scores = forward(params, drug_h, protein_h, edges)
    scores = jax.tree_util.tree_map(jax.block_until_ready, scores)

    ref = _reference(params, drug_h, protein_h, edges)
    for et in scores:
        assert scores[et].shape == ref[et].shape, et
        assert jnp.allclose(scores[et], ref[et], atol=1e-4, rtol=1e-4), et

    print("KERNEL_OK")
</pallas_src>

<mosaic_0001>
module attributes {stable_mosaic.version = 11 : i64} {
  func.func @_edge_score_kernel(%arg0: i32, %arg1: memref<128x32xf32, #tpu.memory_space<vmem>>, %arg2: memref<128x32xf32, #tpu.memory_space<vmem>>, %arg3: memref<32x32xf32, #tpu.memory_space<vmem>>, %arg4: memref<1x128xf32, #tpu.memory_space<vmem>>) attributes {dimension_semantics = [#tpu.dimension_semantics<parallel>], iteration_bounds = array<i64: 1>, scalar_prefetch = 0 : i64, scratch_operands = 0 : i64, tpu.core_type = #tpu.core_type<tc>, window_params = [{transform_indices = @transform_0, window_bounds = array<i64: 128, 32>}, {transform_indices = @transform_1, window_bounds = array<i64: 128, 32>}, {pipeline_mode = #tpu.pipeline_mode<synchronous>, transform_indices = @transform_2, window_bounds = array<i64: 32, 32>}, {transform_indices = @transform_3, window_bounds = array<i64: 1, 128>}]} {
    %c0 = arith.constant 0 : index
    %c0_0 = arith.constant 0 : index
    %0 = vector.load %arg1[%c0, %c0_0] : memref<128x32xf32, #tpu.memory_space<vmem>>, vector<128x32xf32>
    %c0_1 = arith.constant 0 : index
    %c0_2 = arith.constant 0 : index
    %1 = vector.load %arg3[%c0_1, %c0_2] : memref<32x32xf32, #tpu.memory_space<vmem>>, vector<32x32xf32>
    %cst = arith.constant dense<0.000000e+00> : vector<128x32xf32>
    %2 = tpu.matmul %0, %1, %cst {dimension_numbers = #tpu.dot_dimension_numbers<[1], [0], [0], [1], [0, 0, 1, 1], [], []>} : vector<128x32xf32>, vector<32x32xf32>, vector<128x32xf32> -> vector<128x32xf32>
    %c0_3 = arith.constant 0 : index
    %c0_4 = arith.constant 0 : index
    %3 = vector.load %arg2[%c0_3, %c0_4] : memref<128x32xf32, #tpu.memory_space<vmem>>, vector<128x32xf32>
    %4 = arith.mulf %2, %3 : vector<128x32xf32>
    %cst_5 = arith.constant dense<0.000000e+00> : vector<128xf32>
    %5 = vector.multi_reduction <add>, %4, %cst_5 [1] : vector<128x32xf32> to vector<128xf32>
    %c0_6 = arith.constant 0 : index
    %c0_7 = arith.constant 0 : index
    %6 = vector.load %arg4[%c0_6, %c0_7] : memref<1x128xf32, #tpu.memory_space<vmem>>, vector<1x128xf32>
    %7 = vector.shape_cast %6 : vector<1x128xf32> to vector<128xf32>
    %8 = vector.shape_cast %5 : vector<128xf32> to vector<1x128xf32>
    tpu.vector_store %arg4[%c0_6, %c0_7], %8 {strides = array<i32>} : memref<1x128xf32, #tpu.memory_space<vmem>>, vector<1x128xf32>,
    return
  }
  func.func @transform_0(%arg0: i32) -> (i32, i32) {
    %c0_i32 = arith.constant 0 : i32
    %c0_i32_0 = arith.constant 0 : i32
    return %arg0, %c0_i32 : i32, i32
  }
  func.func @transform_1(%arg0: i32) -> (i32, i32) {
    %c0_i32 = arith.constant 0 : i32
    %c0_i32_0 = arith.constant 0 : i32
    return %arg0, %c0_i32 : i32, i32
  }
  func.func @transform_2(%arg0: i32) -> (i32, i32) {
    %c0_i32 = arith.constant 0 : i32
    %c0_i32_0 = arith.constant 0 : i32
    %c0_i32_1 = arith.constant 0 : i32
    return %c0_i32, %c0_i32_0 : i32, i32
  }
  func.func @transform_3(%arg0: i32) -> (i32, i32) {
    %c0_i32 = arith.constant 0 : i32
    %c0_i32_0 = arith.constant 0 : i32
    return %c0_i32, %arg0 : i32, i32
  }
}

module attributes {stable_mosaic.version = 11 : i64} {
  func.func @_edge_score_kernel(%arg0: i32, %arg1: memref<128x32xf32, #tpu.memory_space<vmem>>, %arg2: memref<128x16xf32, #tpu.memory_space<vmem>>, %arg3: memref<32x16xf32, #tpu.memory_space<vmem>>, %arg4: memref<1x128xf32, #tpu.memory_space<vmem>>) attributes {dimension_semantics = [#tpu.dimension_semantics<parallel>], iteration_bounds = array<i64: 1>, scalar_prefetch = 0 : i64, scratch_operands = 0 : i64, tpu.core_type = #tpu.core_type<tc>, window_params = [{transform_indices = @transform_0, window_bounds = array<i64: 128, 32>}, {transform_indices = @transform_1, window_bounds = array<i64: 128, 16>}, {pipeline_mode = #tpu.pipeline_mode<synchronous>, transform_indices = @transform_2, window_bounds = array<i64: 32, 16>}, {transform_indices = @transform_3, window_bounds = array<i64: 1, 128>}]} {
    %c0 = arith.constant 0 : index
    %c0_0 = arith.constant 0 : index
    %0 = vector.load %arg1[%c0, %c0_0] : memref<128x32xf32, #tpu.memory_space<vmem>>, vector<128x32xf32>
    %c0_1 = arith.constant 0 : index
    %c0_2 = arith.constant 0 : index
    %1 = vector.load %arg3[%c0_1, %c0_2] : memref<32x16xf32, #tpu.memory_space<vmem>>, vector<32x16xf32>
    %cst = arith.constant dense<0.000000e+00> : vector<128x16xf32>
    %2 = tpu.matmul %0, %1, %cst {dimension_numbers = #tpu.dot_dimension_numbers<[1], [0], [0], [1], [0, 0, 1, 1], [], []>} : vector<128x32xf32>, vector<32x16xf32>, vector<128x16xf32> -> vector<128x16xf32>
    %c0_3 = arith.constant 0 : index
    %c0_4 = arith.constant 0 : index
    %3 = vector.load %arg2[%c0_3, %c0_4] : memref<128x16xf32, #tpu.memory_space<vmem>>, vector<128x16xf32>
    %4 = arith.mulf %2, %3 : vector<128x16xf32>
    %cst_5 = arith.constant dense<0.000000e+00> : vector<128xf32>
    %5 = vector.multi_reduction <add>, %4, %cst_5 [1] : vector<128x16xf32> to vector<128xf32>
    %c0_6 = arith.constant 0 : index
    %c0_7 = arith.constant 0 : index
    %6 = vector.load %arg4[%c0_6, %c0_7] : memref<1x128xf32, #tpu.memory_space<vmem>>, vector<1x128xf32>
    %7 = vector.shape_cast %6 : vector<1x128xf32> to vector<128xf32>
    %8 = vector.shape_cast %5 : vector<128xf32> to vector<1x128xf32>
    tpu.vector_store %arg4[%c0_6, %c0_7], %8 {strides = array<i32>} : memref<1x128xf32, #tpu.memory_space<vmem>>, vector<1x128xf32>,
    return
  }
  func.func @transform_0(%arg0: i32) -> (i32, i32) {
    %c0_i32 = arith.constant 0 : i32
    %c0_i32_0 = arith.constant 0 : i32
    return %arg0, %c0_i32 : i32, i32
  }
  func.func @transform_1(%arg0: i32) -> (i32, i32) {
    %c0_i32 = arith.constant 0 : i32
    %c0_i32_0 = arith.constant 0 : i32
    return %arg0, %c0_i32 : i32, i32
  }
  func.func @transform_2(%arg0: i32) -> (i32, i32) {
    %c0_i32 = arith.constant 0 : i32
    %c0_i32_0 = arith.constant 0 : i32
    %c0_i32_1 = arith.constant 0 : i32
    return %c0_i32, %c0_i32_0 : i32, i32
  }
  func.func @transform_3(%arg0: i32) -> (i32, i32) {
    %c0_i32 = arith.constant 0 : i32
    %c0_i32_0 = arith.constant 0 : i32
    return %c0_i32, %arg0 : i32, i32
  }
}

module attributes {stable_mosaic.version = 11 : i64} {
  func.func @_edge_score_kernel(%arg0: i32, %arg1: memref<128x16xf32, #tpu.memory_space<vmem>>, %arg2: memref<128x16xf32, #tpu.memory_space<vmem>>, %arg3: memref<16x16xf32, #tpu.memory_space<vmem>>, %arg4: memref<1x128xf32, #tpu.memory_space<vmem>>) attributes {dimension_semantics = [#tpu.dimension_semantics<parallel>], iteration_bounds = array<i64: 3>, scalar_prefetch = 0 : i64, scratch_operands = 0 : i64, tpu.core_type = #tpu.core_type<tc>, window_params = [{transform_indices = @transform_0, window_bounds = array<i64: 128, 16>}, {transform_indices = @transform_1, window_bounds = array<i64: 128, 16>}, {pipeline_mode = #tpu.pipeline_mode<synchronous>, transform_indices = @transform_2, window_bounds = array<i64: 16, 16>}, {transform_indices = @transform_3, window_bounds = array<i64: 1, 128>}]} {
    %c0 = arith.constant 0 : index
    %c0_0 = arith.constant 0 : index
    %0 = vector.load %arg1[%c0, %c0_0] : memref<128x16xf32, #tpu.memory_space<vmem>>, vector<128x16xf32>
    %c0_1 = arith.constant 0 : index
    %c0_2 = arith.constant 0 : index
    %1 = vector.load %arg3[%c0_1, %c0_2] : memref<16x16xf32, #tpu.memory_space<vmem>>, vector<16x16xf32>
    %cst = arith.constant dense<0.000000e+00> : vector<128x16xf32>
    %2 = tpu.matmul %0, %1, %cst {dimension_numbers = #tpu.dot_dimension_numbers<[1], [0], [0], [1], [0, 0, 1, 1], [], []>} : vector<128x16xf32>, vector<16x16xf32>, vector<128x16xf32> -> vector<128x16xf32>
    %c0_3 = arith.constant 0 : index
    %c0_4 = arith.constant 0 : index
    %3 = vector.load %arg2[%c0_3, %c0_4] : memref<128x16xf32, #tpu.memory_space<vmem>>, vector<128x16xf32>
    %4 = arith.mulf %2, %3 : vector<128x16xf32>
    %cst_5 = arith.constant dense<0.000000e+00> : vector<128xf32>
    %5 = vector.multi_reduction <add>, %4, %cst_5 [1] : vector<128x16xf32> to vector<128xf32>
    %c0_6 = arith.constant 0 : index
    %c0_7 = arith.constant 0 : index
    %6 = vector.load %arg4[%c0_6, %c0_7] : memref<1x128xf32, #tpu.memory_space<vmem>>, vector<1x128xf32>
    %7 = vector.shape_cast %6 : vector<1x128xf32> to vector<128xf32>
    %8 = vector.shape_cast %5 : vector<128xf32> to vector<1x128xf32>
    tpu.vector_store %arg4[%c0_6, %c0_7], %8 {strides = array<i32>} : memref<1x128xf32, #tpu.memory_space<vmem>>, vector<1x128xf32>,
    return
  }
  func.func @transform_0(%arg0: i32) -> (i32, i32) {
    %c0_i32 = arith.constant 0 : i32
    %c0_i32_0 = arith.constant 0 : i32
    return %arg0, %c0_i32 : i32, i32
  }
  func.func @transform_1(%arg0: i32) -> (i32, i32) {
    %c0_i32 = arith.constant 0 : i32
    %c0_i32_0 = arith.constant 0 : i32
    return %arg0, %c0_i32 : i32, i32
  }
  func.func @transform_2(%arg0: i32) -> (i32, i32) {
    %c0_i32 = arith.constant 0 : i32
    %c0_i32_0 = arith.constant 0 : i32
    %c0_i32_1 = arith.constant 0 : i32
    return %c0_i32, %c0_i32_0 : i32, i32
  }
  func.func @transform_3(%arg0: i32) -> (i32, i32) {
    %c0_i32 = arith.constant 0 : i32
    %c0_i32_0 = arith.constant 0 : i32
    return %c0_i32, %arg0 : i32, i32
  }
}

</mosaic_0001>

<llo_original>
// kernel: decagon_decoder_forward.4
$region0: #{decagon_decoder_forward.4}
  #allocation0 [shape = 'u32[]', space=smem, size = 0x4, offset = 0x4, fixed_abs, tag = 'smem constant byte address 0x4 - core index']
  #allocation1 [shape = 'u32[144,128]{1,0:T(1,128)}', space=vmem, size = 0x12000, scoped, tag = 'internal scratch']
  %s0 = inlined_call_operand.vmem [shape: f32[128,32], index: 0, kind: input, shape index: {}]
  %s1 = inlined_call_operand.vmem [shape: f32[128,16], index: 1, kind: input, shape index: {}]
  %s2 = inlined_call_operand.vmem [shape: f32[32,16], index: 2, kind: input, shape index: {}]
  %s3 = inlined_call_operand.vmem [shape: f32[1,128], index: 3, kind: output, shape index: {}]
  %s4 = sld [smem:[#allocation0]]
  $region22: #{decagon_decoder_forward.4} parent=0
    _
  %s6 = ssub.s32 1, %s4
  %s7 = scalar_select 0, %s6, %s4
  // Predicated region
  $region2: #{decagon_decoder_forward.4} parent=0 // pred_check
    _
  $region3: #{decagon_decoder_forward.4} parent=0 // pred_check_branch
    %9 = sbr.rel (0) target = $region5
  $region4: #{decagon_decoder_forward.4} parent=0 // pred_region
    _
  $region5: #{decagon_decoder_forward.4} parent=0 // pred_fallthru
    _
  // Predicated region
  $region6: #{decagon_decoder_forward.4} parent=0 // pred_check
    _
  $region7: #{decagon_decoder_forward.4} parent=0 // pred_check_branch
    %11 = sbr.rel (0) target = $region9
  $region8: #{decagon_decoder_forward.4} parent=0 // pred_region
    _
  $region9: #{decagon_decoder_forward.4} parent=0 // pred_fallthru
    _
  // Predicated region
  $region10: #{decagon_decoder_forward.4} parent=0 // pred_check
    _
  $region11: #{decagon_decoder_forward.4} parent=0 // pred_check_branch
    %13 = sbr.rel (0) target = $region13
  $region12: #{decagon_decoder_forward.4} parent=0 // pred_region
    _
  $region13: #{decagon_decoder_forward.4} parent=0 // pred_fallthru
    _
  %v14 = vld [vmem:[%s0] sm:$0xff]
  %v15 = vld [vmem:[%s0 + $0x8] sm:$0xff]
  %v16 = vld [vmem:[%s0 + $0x10] sm:$0xff]
  %v17 = vld [vmem:[%s0 + $0x18] sm:$0xff]
  %v18 = vld [vmem:[%s0 + $0x20] sm:$0xff]
  %v19 = vld [vmem:[%s0 + $0x28] sm:$0xff]
  %v20 = vld [vmem:[%s0 + $0x30] sm:$0xff]
  %v21 = vld [vmem:[%s0 + $0x38] sm:$0xff]
  %v22 = vld [vmem:[%s0 + $0x40] sm:$0xff]
  %v23 = vld [vmem:[%s0 + $0x48] sm:$0xff]
  %v24 = vld [vmem:[%s0 + $0x50] sm:$0xff]
  %v25 = vld [vmem:[%s0 + $0x58] sm:$0xff]
  %v26 = vld [vmem:[%s0 + $0x60] sm:$0xff]
  %v27 = vld [vmem:[%s0 + $0x68] sm:$0xff]
  %v28 = vld [vmem:[%s0 + $0x70] sm:$0xff]
  %v29 = vld [vmem:[%s0 + $0x78] sm:$0xff]
  %v30 = vld [vmem:[%s2] sm:$0xff]
  %v31 = vld [vmem:[%s2 + $0x8] sm:$0xff]
  %v32 = vld [vmem:[%s2 + $0x10] sm:$0xff]
  %v33 = vld [vmem:[%s2 + $0x18] sm:$0xff]
  %vm34 = vcmask 261120
  %v36 = vsel %vm34, %v14, 0
  %v39 = vsel %vm34, %v15, 0
  %v42 = vsel %vm34, %v16, 0
  %v45 = vsel %vm34, %v17, 0
  %v48 = vsel %vm34, %v18, 0
  %v51 = vsel %vm34, %v19, 0
  %v54 = vsel %vm34, %v20, 0
  %v57 = vsel %vm34, %v21, 0
  %v60 = vsel %vm34, %v22, 0
  %v63 = vsel %vm34, %v23, 0
  %v66 = vsel %vm34, %v24, 0
  %v69 = vsel %vm34, %v25, 0
  %v72 = vsel %vm34, %v26, 0
  %v75 = vsel %vm34, %v27, 0
  %v78 = vsel %vm34, %v28, 0
  %v81 = vsel %vm34, %v29, 0
  %83 = vmatprep.subr.mxu0 0.0
  %84 = vmatpush1.msra.mxu0 %v30
  %85 = vmatprep.subr.mxu0 0.0
  %86 = vmatpush1.msra.mxu0 %v31
  %87 = vmatprep.subr.mxu0 0.0
  %88 = vmatpush1.msra.mxu0 %v32
  %89 = vmatprep.subr.mxu0 0.0
  %90 = vmatpush1.msra.mxu0 %v33
  %91 = vmatprep.subr.mxu0 0.0
  %92 = vmatpush1.msra.mxu0 0.0
  %93 = vmatprep.subr.mxu0 0.0
  %94 = vmatpush1.msra.mxu0 0.0
  %95 = vmatprep.subr.mxu0 0.0
  %96 = vmatpush1.msra.mxu0 0.0
  %97 = vmatprep.subr.mxu0 0.0
  %98 = vmatpush1.msra.mxu0 0.0
  %99 = vmatprep.subr.mxu0 0.0
  %100 = vmatpush1.msra.mxu0 0.0
  %101 = vmatprep.subr.mxu0 0.0
  %102 = vmatpush1.msra.mxu0 0.0
  %103 = vmatprep.subr.mxu0 0.0
  %104 = vmatpush1.msra.mxu0 0.0
  %105 = vmatprep.subr.mxu0 0.0
  %106 = vmatpush1.msra.mxu0 0.0
  %107 = vmatprep.subr.mxu0 0.0
  %108 = vmatpush1.msra.mxu0 0.0
  %109 = vmatprep.subr.mxu0 0.0
  %110 = vmatpush1.msra.mxu0 0.0
  %111 = vmatprep.subr.mxu0 0.0
  %112 = vmatpush1.msra.mxu0 0.0
  %113 = vmatprep.subr.mxu0 0.0
  %114 = vmatpush1.msra.mxu0 0.0
  %115 = vmatprep.subr.mxu0 0.0
  %116 = vmatpush1.msra.mxu0 0.0
  %117 = vmatprep.subr.mxu0 0.0
  %118 = vmatpush1.msra.mxu0 0.0
  %119 = vmatprep.subr.mxu0 0.0
  %120 = vmatpush1.msra.mxu0 0.0
  %121 = vmatprep.subr.mxu0 0.0
  %122 = vmatpush1.msra.mxu0 0.0
  %123 = vmatprep.subr.mxu0 0.0
  %124 = vmatpush1.msra.mxu0 0.0
  %125 = vmatprep.subr.mxu0 0.0
  %126 = vmatpush1.msra.mxu0 0.0
  %127 = vmatprep.subr.mxu0 0.0
  %128 = vmatpush1.msra.mxu0 0.0
  %129 = vmatprep.subr.mxu0 0.0
  %130 = vmatpush1.msra.mxu0 0.0
  %131 = vmatprep.subr.mxu0 0.0
  %132 = vmatpush1.msra.mxu0 0.0
  %133 = vmatprep.subr.mxu0 0.0
  %134 = vmatpush1.msra.mxu0 0.0
  %135 = vmatprep.subr.mxu0 0.0
  %136 = vmatpush1.msra.mxu0 0.0
  %137 = vmatprep.subr.mxu0 0.0
  %138 = vmatpush1.msra.mxu0 0.0
  %139 = vmatprep.subr.mxu0 0.0
  %140 = vmatpush1.msra.mxu0 0.0
  %141 = vmatprep.subr.mxu0 0.0
  %142 = vmatpush1.msra.mxu0 0.0
  %143 = vmatprep.subr.mxu0 0.0
  %144 = vmatpush1.msra.mxu0 0.0
  %145 = vmatprep.subr.mxu0 0.0
  %146 = vmatpush1.msra.mxu0 0.0
  %147 = vmatprep.mubr.f32.mxu0 0.0
  %148 = vmatmul.mubr.f32.gmra.mrb[0].mxu0 %v36
  %v149 = vpop.f32.mrb[0].mxu0
  %v150 = vadd.f32 0.0, %v149
  %v151 = vpop.f32.mrb[0].mxu0
  %152 = vmatprep.mubr.f32.mxu0 0.0
  %153 = vmatmul.mubr.f32.gmra.mrb[0].mxu0 %v39
  %v154 = vpop.f32.mrb[0].mxu0
  %v155 = vadd.f32 0.0, %v154
  %v156 = vpop.f32.mrb[0].mxu0
  %157 = vmatprep.mubr.f32.mxu0 0.0
  %158 = vmatmul.mubr.f32.gmra.mrb[0].mxu0 %v42
  %v159 = vpop.f32.mrb[0].mxu0
  %v160 = vadd.f32 0.0, %v159
  %v161 = vpop.f32.mrb[0].mxu0
  %162 = vmatprep.mubr.f32.mxu0 0.0
  %163 = vmatmul.mubr.f32.gmra.mrb[0].mxu0 %v45
  %v164 = vpop.f32.mrb[0].mxu0
  %v165 = vadd.f32 0.0, %v164
  %v166 = vpop.f32.mrb[0].mxu0
  %167 = vmatprep.mubr.f32.mxu0 0.0
  %168 = vmatmul.mubr.f32.gmra.mrb[0].mxu0 %v48
  %v169 = vpop.f32.mrb[0].mxu0
  %v170 = vadd.f32 0.0, %v169
  %v171 = vpop.f32.mrb[0].mxu0
  %172 = vmatprep.mubr.f32.mxu0 0.0
  %173 = vmatmul.mubr.f32.gmra.mrb[0].mxu0 %v51
  %v174 = vpop.f32.mrb[0].mxu0
  %v175 = vadd.f32 0.0, %v174
  %v176 = vpop.f32.mrb[0].mxu0
  %177 = vmatprep.mubr.f32.mxu0 0.0
  %178 = vmatmul.mubr.f32.gmra.mrb[0].mxu0 %v54
  %v179 = vpop.f32.mrb[0].mxu0
  %v180 = vadd.f32 0.0, %v179
  %v181 = vpop.f32.mrb[0].mxu0
  %182 = vmatprep.mubr.f32.mxu0 0.0
  %183 = vmatmul.mubr.f32.gmra.mrb[0].mxu0 %v57
  %v184 = vpop.f32.mrb[0].mxu0
  %v185 = vadd.f32 0.0, %v184
  %v186 = vpop.f32.mrb[0].mxu0
  %187 = vmatprep.mubr.f32.mxu0 0.0
  %188 = vmatmul.mubr.f32.gmra.mrb[0].mxu0 %v60
  %v189 = vpop.f32.mrb[0].mxu0
  %v190 = vadd.f32 0.0, %v189
  %v191 = vpop.f32.mrb[0].mxu0
  %192 = vmatprep.mubr.f32.mxu0 0.0
  %193 = vmatmul.mubr.f32.gmra.mrb[0].mxu0 %v63
  %v194 = vpop.f32.mrb[0].mxu0
  %v195 = vadd.f32 0.0, %v194
  %v196 = vpop.f32.mrb[0].mxu0
  %197 = vmatprep.mubr.f32.mxu0 0.0
  %198 = vmatmul.mubr.f32.gmra.mrb[0].mxu0 %v66
  %v199 = vpop.f32.mrb[0].mxu0
  %v200 = vadd.f32 0.0, %v199
  %v201 = vpop.f32.mrb[0].mxu0
  %202 = vmatprep.mubr.f32.mxu0 0.0
  %203 = vmatmul.mubr.f32.gmra.mrb[0].mxu0 %v69
  %v204 = vpop.f32.mrb[0].mxu0
  %v205 = vadd.f32 0.0, %v204
  %v206 = vpop.f32.mrb[0].mxu0
  %207 = vmatprep.mubr.f32.mxu0 0.0
  %208 = vmatmul.mubr.f32.gmra.mrb[0].mxu0 %v72
  %v209 = vpop.f32.mrb[0].mxu0
  %v210 = vadd.f32 0.0, %v209
  %v211 = vpop.f32.mrb[0].mxu0
  %212 = vmatprep.mubr.f32.mxu0 0.0
  %213 = vmatmul.mubr.f32.gmra.mrb[0].mxu0 %v75
  %v214 = vpop.f32.mrb[0].mxu0
  %v215 = vadd.f32 0.0, %v214
  %v216 = vpop.f32.mrb[0].mxu0
  %217 = vmatprep.mubr.f32.mxu0 0.0
  %218 = vmatmul.mubr.f32.gmra.mrb[0].mxu0 %v78
  %v219 = vpop.f32.mrb[0].mxu0
  %v220 = vadd.f32 0.0, %v219
  %v221 = vpop.f32.mrb[0].mxu0
  %222 = vmatprep.mubr.f32.mxu0 0.0
  %223 = vmatmul.mubr.f32.gmra.mrb[0].mxu0 %v81
  %v224 = vpop.f32.mrb[0].mxu0
  %v225 = vadd.f32 0.0, %v224
  %v226 = vpop.f32.mrb[0].mxu0
  %227 = vdwg.mxu0
  %v228 = vld [vmem:[%s1] sm:$0xff]
  %v229 = vld [vmem:[%s1 + $0x8] sm:$0xff]
  %v230 = vld [vmem:[%s1 + $0x10] sm:$0xff]
  %v231 = vld [vmem:[%s1 + $0x18] sm:$0xff]
  %v232 = vld [vmem:[%s1 + $0x20] sm:$0xff]
  %v233 = vld [vmem:[%s1 + $0x28] sm:$0xff]
  %v234 = vld [vmem:[%s1 + $0x30] sm:$0xff]
  %v235 = vld [vmem:[%s1 + $0x38] sm:$0xff]
  %v236 = vld [vmem:[%s1 + $0x40] sm:$0xff]
  %v237 = vld [vmem:[%s1 + $0x48] sm:$0xff]
  %v238 = vld [vmem:[%s1 + $0x50] sm:$0xff]
  %v239 = vld [vmem:[%s1 + $0x58] sm:$0xff]
  %v240 = vld [vmem:[%s1 + $0x60] sm:$0xff]
  %v241 = vld [vmem:[%s1 + $0x68] sm:$0xff]
  %v242 = vld [vmem:[%s1 + $0x70] sm:$0xff]
  %v243 = vld [vmem:[%s1 + $0x78] sm:$0xff]
  %v244 = vmul.f32 %v150, %v228
  %v245 = vmul.f32 %v155, %v229
  %v246 = vmul.f32 %v160, %v230
  %v247 = vmul.f32 %v165, %v231
  %v248 = vmul.f32 %v170, %v232
  %v249 = vmul.f32 %v175, %v233
  %v250 = vmul.f32 %v180, %v234
  %v251 = vmul.f32 %v185, %v235
  %v252 = vmul.f32 %v190, %v236
  %v253 = vmul.f32 %v195, %v237
  %v254 = vmul.f32 %v200, %v238
  %v255 = vmul.f32 %v205, %v239
  %v256 = vmul.f32 %v210, %v240
  %v257 = vmul.f32 %v215, %v241
  %v258 = vmul.f32 %v220, %v242
  %v259 = vmul.f32 %v225, %v243
  %vm260 = vcmask 130048
  %v261 = vsel %vm260, %v244, 0.0
  %262 = vadd.xlane.f32.xlu0 %v261
  %v263 = vpop.xlane.xlu0 %262
  %v264 = vsel %vm260, %v245, 0.0
  %265 = vadd.xlane.f32.xlu0 %v264
  %v266 = vpop.xlane.xlu0 %265
  %v267 = vsel %vm260, %v246, 0.0
  %268 = vadd.xlane.f32.xlu0 %v267
  %v269 = vpop.xlane.xlu0 %268
  %v270 = vsel %vm260, %v247, 0.0
  %271 = vadd.xlane.f32.xlu0 %v270
  %v272 = vpop.xlane.xlu0 %271
  %v273 = vsel %vm260, %v248, 0.0
  %274 = vadd.xlane.f32.xlu0 %v273
  %v275 = vpop.xlane.xlu0 %274
  %v276 = vsel %vm260, %v249, 0.0
  %277 = vadd.xlane.f32.xlu0 %v276
  %v278 = vpop.xlane.xlu0 %277
  %v279 = vsel %vm260, %v250, 0.0
  %280 = vadd.xlane.f32.xlu0 %v279
  %v281 = vpop.xlane.xlu0 %280
  %v282 = vsel %vm260, %v251, 0.0
  %283 = vadd.xlane.f32.xlu0 %v282
  %v284 = vpop.xlane.xlu0 %283
  %v285 = vsel %vm260, %v252, 0.0
  %286 = vadd.xlane.f32.xlu0 %v285
  %v287 = vpop.xlane.xlu0 %286
  %v288 = vsel %vm260, %v253, 0.0
  %289 = vadd.xlane.f32.xlu0 %v288
  %v290 = vpop.xlane.xlu0 %289
  %v291 = vsel %vm260, %v254, 0.0
  %292 = vadd.xlane.f32.xlu0 %v291
  %v293 = vpop.xlane.xlu0 %292
  %v294 = vsel %vm260, %v255, 0.0
  %295 = vadd.xlane.f32.xlu0 %v294
  %v296 = vpop.xlane.xlu0 %295
  %v297 = vsel %vm260, %v256, 0.0
  %298 = vadd.xlane.f32.xlu0 %v297
  %v299 = vpop.xlane.xlu0 %298
  %v300 = vsel %vm260, %v257, 0.0
  %301 = vadd.xlane.f32.xlu0 %v300
  %v302 = vpop.xlane.xlu0 %301
  %v303 = vsel %vm260, %v258, 0.0
  %304 = vadd.xlane.f32.xlu0 %v303
  %v305 = vpop.xlane.xlu0 %304
  %v306 = vsel %vm260, %v259, 0.0
  %307 = vadd.xlane.f32.xlu0 %v306
  %v308 = vpop.xlane.xlu0 %307
  %v325 = vlaneseq
  %v326 = vand.u32 %v325, 127
  %v327 = vlaneseq
  %v328 = vshrl.u32 %v327, 7
  %v329 = vsub.s32 %v326, %v328
  %v330 = vrot.slane %v263, %v329
  %v331 = vadd.s32 %v326, 4294967288
  %v332 = vlaneseq
  %v333 = vshrl.u32 %v332, 7
  %v334 = vsub.s32 %v331, %v333
  %v335 = vrot.slane %v266, %v334
  %vm336 = vcmask 130112
  %v337 = vsel %vm336, %v335, %v330
  %v338 = vadd.s32 %v326, 4294967280
  %v339 = vlaneseq
  %v340 = vshrl.u32 %v339, 7
  %v341 = vsub.s32 %v338, %v340
  %v342 = vrot.slane %v269, %v341
  %vm343 = vcmask 195712
  %v344 = vsel %vm343, %v342, %v337
  %v345 = vadd.s32 %v326, 4294967272
  %v346 = vlaneseq
  %v347 = vshrl.u32 %v346, 7
  %v348 = vsub.s32 %v345, %v347
  %v349 = vrot.slane %v272, %v348
  %vm350 = vcmask 261312
  %v351 = vsel %vm350, %v349, %v344
  %v352 = vadd.s32 %v326, 4294967264
  %v353 = vlaneseq
  %v354 = vshrl.u32 %v353, 7
  %v355 = vsub.s32 %v352, %v354
  %v356 = vrot.slane %v275, %v355
  %vm357 = vcmask 326912
  %v358 = vsel %vm357, %v356, %v351
  %v359 = vadd.s32 %v326, 4294967256
  %v360 = vlaneseq
  %v361 = vshrl.u32 %v360, 7
  %v362 = vsub.s32 %v359, %v361
  %v363 = vrot.slane %v278, %v362
  %vm364 = vcmask 392512
  %v365 = vsel %vm364, %v363, %v358
  %v366 = vadd.s32 %v326, 4294967248
  %v367 = vlaneseq
  %v368 = vshrl.u32 %v367, 7
  %v369 = vsub.s32 %v366, %v368
  %v370 = vrot.slane %v281, %v369
  %vm371 = vcmask 458112
  %v372 = vsel %vm371, %v370, %v365
  %v373 = vadd.s32 %v326, 4294967240
  %v374 = vlaneseq
  %v375 = vshrl.u32 %v374, 7
  %v376 = vsub.s32 %v373, %v375
  %v377 = vrot.slane %v284, %v376
  %vm378 = vcmask 523712
  %v379 = vsel %vm378, %v377, %v372
  %v380 = vadd.s32 %v326, 4294967232
  %v381 = vlaneseq
  %v382 = vshrl.u32 %v381, 7
  %v383 = vsub.s32 %v380, %v382
  %v384 = vrot.slane %v287, %v383
  %vm385 = vcmask 589312
  %v386 = vsel %vm385, %v384, %v379
  %v387 = vadd.s32 %v326, 4294967224
  %v388 = vlaneseq
  %v389 = vshrl.u32 %v388, 7
  %v390 = vsub.s32 %v387, %v389
  %v391 = vrot.slane %v290, %v390
  %vm392 = vcmask 654912
  %v393 = vsel %vm392, %v391, %v386
  %v394 = vadd.s32 %v326, 4294967216
  %v395 = vlaneseq
  %v396 = vshrl.u32 %v395, 7
  %v397 = vsub.s32 %v394, %v396
  %v398 = vrot.slane %v293, %v397
  %vm399 = vcmask 720512
  %v400 = vsel %vm399, %v398, %v393
  %v401 = vadd.s32 %v326, 4294967208
  %v402 = vlaneseq
  %v403 = vshrl.u32 %v402, 7
  %v404 = vsub.s32 %v401, %v403
  %v405 = vrot.slane %v296, %v404
  %vm406 = vcmask 786112
  %v407 = vsel %vm406, %v405, %v400
  %v408 = vadd.s32 %v326, 4294967200
  %v409 = vlaneseq
  %v410 = vshrl.u32 %v409, 7
  %v411 = vsub.s32 %v408, %v410
  %v412 = vrot.slane %v299, %v411
  %vm413 = vcmask 851712
  %v414 = vsel %vm413, %v412, %v407
  %v415 = vadd.s32 %v326, 4294967192
  %v416 = vlaneseq
  %v417 = vshrl.u32 %v416, 7
  %v418 = vsub.s32 %v415, %v417
  %v419 = vrot.slane %v302, %v418
  %vm420 = vcmask 917312
  %v421 = vsel %vm420, %v419, %v414
  %v422 = vadd.s32 %v326, 4294967184
  %v423 = vlaneseq
  %v424 = vshrl.u32 %v423, 7
  %v425 = vsub.s32 %v422, %v424
  %v426 = vrot.slane %v305, %v425
  %vm427 = vcmask 982912
  %v428 = vsel %vm427, %v426, %v421
  %v429 = vadd.s32 %v326, 4294967176
  %v430 = vlaneseq
  %v431 = vshrl.u32 %v430, 7
  %v432 = vsub.s32 %v429, %v431
  %v433 = vrot.slane %v308, %v432
  %vm434 = vcmask 1048512
  %v435 = vsel %vm434, %v433, %v428
  %437 = vst [vmem:[%s3] sm:$0x1] %v435
  // Predicated region
  $region14: #{decagon_decoder_forward.4} parent=0 // pred_check
    _
  $region15: #{decagon_decoder_forward.4} parent=0 // pred_check_branch
    %439 = sbr.rel (0) target = $region17
  $region16: #{decagon_decoder_forward.4} parent=0 // pred_region
    _
  $region17: #{decagon_decoder_forward.4} parent=0 // pred_fallthru
    _
  // Predicated region
  $region18: #{decagon_decoder_forward.4} parent=0 // pred_check
    _
  $region19: #{decagon_decoder_forward.4} parent=0 // pred_check_branch
    %441 = sbr.rel (0) target = $region21
  $region20: #{decagon_decoder_forward.4} parent=0 // pred_region
    _
  $region21: #{decagon_decoder_forward.4} parent=0 // pred_fallthru
    _

// kernel: decagon_decoder_forward.5
$region0: #{decagon_decoder_forward.5}
  #allocation0 [shape = 'u32[]', space=smem, size = 0x4, offset = 0x4, fixed_abs, tag = 'smem constant byte address 0x4 - core index']
  #allocation1 [shape = 'u32[144,128]{1,0:T(1,128)}', space=vmem, size = 0x12000, scoped, tag = 'internal scratch']
  %s0 = inlined_call_operand.vmem [shape: f32[128,32], index: 0, kind: input, shape index: {}]
  %s1 = inlined_call_operand.vmem [shape: f32[128,32], index: 1, kind: input, shape index: {}]
  %s2 = inlined_call_operand.vmem [shape: f32[32,32], index: 2, kind: input, shape index: {}]
  %s3 = inlined_call_operand.vmem [shape: f32[1,128], index: 3, kind: output, shape index: {}]
  %s4 = sld [smem:[#allocation0]]
  $region22: #{decagon_decoder_forward.5} parent=0
    _
  %s6 = ssub.s32 1, %s4
  %s7 = scalar_select 0, %s6, %s4
  // Predicated region
  $region2: #{decagon_decoder_forward.5} parent=0 // pred_check
    _
  $region3: #{decagon_decoder_forward.5} parent=0 // pred_check_branch
    %9 = sbr.rel (0) target = $region5
  $region4: #{decagon_decoder_forward.5} parent=0 // pred_region
    _
  $region5: #{decagon_decoder_forward.5} parent=0 // pred_fallthru
    _
  // Predicated region
  $region6: #{decagon_decoder_forward.5} parent=0 // pred_check
    _
  $region7: #{decagon_decoder_forward.5} parent=0 // pred_check_branch
    %11 = sbr.rel (0) target = $region9
  $region8: #{decagon_decoder_forward.5} parent=0 // pred_region
    _
  $region9: #{decagon_decoder_forward.5} parent=0 // pred_fallthru
    _
  // Predicated region
  $region10: #{decagon_decoder_forward.5} parent=0 // pred_check
    _
  $region11: #{decagon_decoder_forward.5} parent=0 // pred_check_branch
    %13 = sbr.rel (0) target = $region13
  $region12: #{decagon_decoder_forward.5} parent=0 // pred_region
    _
  $region13: #{decagon_decoder_forward.5} parent=0 // pred_fallthru
    _
  %v14 = vld [vmem:[%s0] sm:$0xff]
  %v15 = vld [vmem:[%s0 + $0x8] sm:$0xff]
  %v16 = vld [vmem:[%s0 + $0x10] sm:$0xff]
  %v17 = vld [vmem:[%s0 + $0x18] sm:$0xff]
  %v18 = vld [vmem:[%s0 + $0x20] sm:$0xff]
  %v19 = vld [vmem:[%s0 + $0x28] sm:$0xff]
  %v20 = vld [vmem:[%s0 + $0x30] sm:$0xff]
  %v21 = vld [vmem:[%s0 + $0x38] sm:$0xff]
  %v22 = vld [vmem:[%s0 + $0x40] sm:$0xff]
  %v23 = vld [vmem:[%s0 + $0x48] sm:$0xff]
  %v24 = vld [vmem:[%s0 + $0x50] sm:$0xff]
  %v25 = vld [vmem:[%s0 + $0x58] sm:$0xff]
  %v26 = vld [vmem:[%s0 + $0x60] sm:$0xff]
  %v27 = vld [vmem:[%s0 + $0x68] sm:$0xff]
  %v28 = vld [vmem:[%s0 + $0x70] sm:$0xff]
  %v29 = vld [vmem:[%s0 + $0x78] sm:$0xff]
  %v30 = vld [vmem:[%s2] sm:$0xff]
  %v31 = vld [vmem:[%s2 + $0x8] sm:$0xff]
  %v32 = vld [vmem:[%s2 + $0x10] sm:$0xff]
  %v33 = vld [vmem:[%s2 + $0x18] sm:$0xff]
  %vm34 = vcmask 261120
  %v36 = vsel %vm34, %v14, 0
  %v39 = vsel %vm34, %v15, 0
  %v42 = vsel %vm34, %v16, 0
  %v45 = vsel %vm34, %v17, 0
  %v48 = vsel %vm34, %v18, 0
  %v51 = vsel %vm34, %v19, 0
  %v54 = vsel %vm34, %v20, 0
  %v57 = vsel %vm34, %v21, 0
  %v60 = vsel %vm34, %v22, 0
  %v63 = vsel %vm34, %v23, 0
  %v66 = vsel %vm34, %v24, 0
  %v69 = vsel %vm34, %v25, 0
  %v72 = vsel %vm34, %v26, 0
  %v75 = vsel %vm34, %v27, 0
  %v78 = vsel %vm34, %v28, 0
  %v81 = vsel %vm34, %v29, 0
  %83 = vmatprep.subr.mxu0 0.0
  %84 = vmatpush1.msra.mxu0 %v30
  %85 = vmatprep.subr.mxu0 0.0
  %86 = vmatpush1.msra.mxu0 %v31
  %87 = vmatprep.subr.mxu0 0.0
  %88 = vmatpush1.msra.mxu0 %v32
  %89 = vmatprep.subr.mxu0 0.0
  %90 = vmatpush1.msra.mxu0 %v33
  %91 = vmatprep.subr.mxu0 0.0
  %92 = vmatpush1.msra.mxu0 0.0
  %93 = vmatprep.subr.mxu0 0.0
  %94 = vmatpush1.msra.mxu0 0.0
  %95 = vmatprep.subr.mxu0 0.0
  %96 = vmatpush1.msra.mxu0 0.0
  %97 = vmatprep.subr.mxu0 0.0
  %98 = vmatpush1.msra.mxu0 0.0
  %99 = vmatprep.subr.mxu0 0.0
  %100 = vmatpush1.msra.mxu0 0.0
  %101 = vmatprep.subr.mxu0 0.0
  %102 = vmatpush1.msra.mxu0 0.0
  %103 = vmatprep.subr.mxu0 0.0
  %104 = vmatpush1.msra.mxu0 0.0
  %105 = vmatprep.subr.mxu0 0.0
  %106 = vmatpush1.msra.mxu0 0.0
  %107 = vmatprep.subr.mxu0 0.0
  %108 = vmatpush1.msra.mxu0 0.0
  %109 = vmatprep.subr.mxu0 0.0
  %110 = vmatpush1.msra.mxu0 0.0
  %111 = vmatprep.subr.mxu0 0.0
  %112 = vmatpush1.msra.mxu0 0.0
  %113 = vmatprep.subr.mxu0 0.0
  %114 = vmatpush1.msra.mxu0 0.0
  %115 = vmatprep.subr.mxu0 0.0
  %116 = vmatpush1.msra.mxu0 0.0
  %117 = vmatprep.subr.mxu0 0.0
  %118 = vmatpush1.msra.mxu0 0.0
  %119 = vmatprep.subr.mxu0 0.0
  %120 = vmatpush1.msra.mxu0 0.0
  %121 = vmatprep.subr.mxu0 0.0
  %122 = vmatpush1.msra.mxu0 0.0
  %123 = vmatprep.subr.mxu0 0.0
  %124 = vmatpush1.msra.mxu0 0.0
  %125 = vmatprep.subr.mxu0 0.0
  %126 = vmatpush1.msra.mxu0 0.0
  %127 = vmatprep.subr.mxu0 0.0
  %128 = vmatpush1.msra.mxu0 0.0
  %129 = vmatprep.subr.mxu0 0.0
  %130 = vmatpush1.msra.mxu0 0.0
  %131 = vmatprep.subr.mxu0 0.0
  %132 = vmatpush1.msra.mxu0 0.0
  %133 = vmatprep.subr.mxu0 0.0
  %134 = vmatpush1.msra.mxu0 0.0
  %135 = vmatprep.subr.mxu0 0.0
  %136 = vmatpush1.msra.mxu0 0.0
  %137 = vmatprep.subr.mxu0 0.0
  %138 = vmatpush1.msra.mxu0 0.0
  %139 = vmatprep.subr.mxu0 0.0
  %140 = vmatpush1.msra.mxu0 0.0
  %141 = vmatprep.subr.mxu0 0.0
  %142 = vmatpush1.msra.mxu0 0.0
  %143 = vmatprep.subr.mxu0 0.0
  %144 = vmatpush1.msra.mxu0 0.0
  %145 = vmatprep.subr.mxu0 0.0
  %146 = vmatpush1.msra.mxu0 0.0
  %147 = vmatprep.mubr.f32.mxu0 0.0
  %148 = vmatmul.mubr.f32.gmra.mrb[0].mxu0 %v36
  %v149 = vpop.f32.mrb[0].mxu0
  %v150 = vadd.f32 0.0, %v149
  %v151 = vpop.f32.mrb[0].mxu0
  %152 = vmatprep.mubr.f32.mxu0 0.0
  %153 = vmatmul.mubr.f32.gmra.mrb[0].mxu0 %v39
  %v154 = vpop.f32.mrb[0].mxu0
  %v155 = vadd.f32 0.0, %v154
  %v156 = vpop.f32.mrb[0].mxu0
  %157 = vmatprep.mubr.f32.mxu0 0.0
  %158 = vmatmul.mubr.f32.gmra.mrb[0].mxu0 %v42
  %v159 = vpop.f32.mrb[0].mxu0
  %v160 = vadd.f32 0.0, %v159
  %v161 = vpop.f32.mrb[0].mxu0
  %162 = vmatprep.mubr.f32.mxu0 0.0
  %163 = vmatmul.mubr.f32.gmra.mrb[0].mxu0 %v45
  %v164 = vpop.f32.mrb[0].mxu0
  %v165 = vadd.f32 0.0, %v164
  %v166 = vpop.f32.mrb[0].mxu0
  %167 = vmatprep.mubr.f32.mxu0 0.0
  %168 = vmatmul.mubr.f32.gmra.mrb[0].mxu0 %v48
  %v169 = vpop.f32.mrb[0].mxu0
  %v170 = vadd.f32 0.0, %v169
  %v171 = vpop.f32.mrb[0].mxu0
  %172 = vmatprep.mubr.f32.mxu0 0.0
  %173 = vmatmul.mubr.f32.gmra.mrb[0].mxu0 %v51
  %v174 = vpop.f32.mrb[0].mxu0
  %v175 = vadd.f32 0.0, %v174
  %v176 = vpop.f32.mrb[0].mxu0
  %177 = vmatprep.mubr.f32.mxu0 0.0
  %178 = vmatmul.mubr.f32.gmra.mrb[0].mxu0 %v54
  %v179 = vpop.f32.mrb[0].mxu0
  %v180 = vadd.f32 0.0, %v179
  %v181 = vpop.f32.mrb[0].mxu0
  %182 = vmatprep.mubr.f32.mxu0 0.0
  %183 = vmatmul.mubr.f32.gmra.mrb[0].mxu0 %v57
  %v184 = vpop.f32.mrb[0].mxu0
  %v185 = vadd.f32 0.0, %v184
  %v186 = vpop.f32.mrb[0].mxu0
  %187 = vmatprep.mubr.f32.mxu0 0.0
  %188 = vmatmul.mubr.f32.gmra.mrb[0].mxu0 %v60
  %v189 = vpop.f32.mrb[0].mxu0
  %v190 = vadd.f32 0.0, %v189
  %v191 = vpop.f32.mrb[0].mxu0
  %192 = vmatprep.mubr.f32.mxu0 0.0
  %193 = vmatmul.mubr.f32.gmra.mrb[0].mxu0 %v63
  %v194 = vpop.f32.mrb[0].mxu0
  %v195 = vadd.f32 0.0, %v194
  %v196 = vpop.f32.mrb[0].mxu0
  %197 = vmatprep.mubr.f32.mxu0 0.0
  %198 = vmatmul.mubr.f32.gmra.mrb[0].mxu0 %v66
  %v199 = vpop.f32.mrb[0].mxu0
  %v200 = vadd.f32 0.0, %v199
  %v201 = vpop.f32.mrb[0].mxu0
  %202 = vmatprep.mubr.f32.mxu0 0.0
  %203 = vmatmul.mubr.f32.gmra.mrb[0].mxu0 %v69
  %v204 = vpop.f32.mrb[0].mxu0
  %v205 = vadd.f32 0.0, %v204
  %v206 = vpop.f32.mrb[0].mxu0
  %207 = vmatprep.mubr.f32.mxu0 0.0
  %208 = vmatmul.mubr.f32.gmra.mrb[0].mxu0 %v72
  %v209 = vpop.f32.mrb[0].mxu0
  %v210 = vadd.f32 0.0, %v209
  %v211 = vpop.f32.mrb[0].mxu0
  %212 = vmatprep.mubr.f32.mxu0 0.0
  %213 = vmatmul.mubr.f32.gmra.mrb[0].mxu0 %v75
  %v214 = vpop.f32.mrb[0].mxu0
  %v215 = vadd.f32 0.0, %v214
  %v216 = vpop.f32.mrb[0].mxu0
  %217 = vmatprep.mubr.f32.mxu0 0.0
  %218 = vmatmul.mubr.f32.gmra.mrb[0].mxu0 %v78
  %v219 = vpop.f32.mrb[0].mxu0
  %v220 = vadd.f32 0.0, %v219
  %v221 = vpop.f32.mrb[0].mxu0
  %222 = vmatprep.mubr.f32.mxu0 0.0
  %223 = vmatmul.mubr.f32.gmra.mrb[0].mxu0 %v81
  %v224 = vpop.f32.mrb[0].mxu0
  %v225 = vadd.f32 0.0, %v224
  %v226 = vpop.f32.mrb[0].mxu0
  %227 = vdwg.mxu0
  %v228 = vld [vmem:[%s1] sm:$0xff]
  %v229 = vld [vmem:[%s1 + $0x8] sm:$0xff]
  %v230 = vld [vmem:[%s1 + $0x10] sm:$0xff]
  %v231 = vld [vmem:[%s1 + $0x18] sm:$0xff]
  %v232 = vld [vmem:[%s1 + $0x20] sm:$0xff]
  %v233 = vld [vmem:[%s1 + $0x28] sm:$0xff]
  %v234 = vld [vmem:[%s1 + $0x30] sm:$0xff]
  %v235 = vld [vmem:[%s1 + $0x38] sm:$0xff]
  %v236 = vld [vmem:[%s1 + $0x40] sm:$0xff]
  %v237 = vld [vmem:[%s1 + $0x48] sm:$0xff]
  %v238 = vld [vmem:[%s1 + $0x50] sm:$0xff]
  %v239 = vld [vmem:[%s1 + $0x58] sm:$0xff]
  %v240 = vld [vmem:[%s1 + $0x60] sm:$0xff]
  %v241 = vld [vmem:[%s1 + $0x68] sm:$0xff]
  %v242 = vld [vmem:[%s1 + $0x70] sm:$0xff]
  %v243 = vld [vmem:[%s1 + $0x78] sm:$0xff]
  %v244 = vmul.f32 %v150, %v228
  %v245 = vmul.f32 %v155, %v229
  %v246 = vmul.f32 %v160, %v230
  %v247 = vmul.f32 %v165, %v231
  %v248 = vmul.f32 %v170, %v232
  %v249 = vmul.f32 %v175, %v233
  %v250 = vmul.f32 %v180, %v234
  %v251 = vmul.f32 %v185, %v235
  %v252 = vmul.f32 %v190, %v236
  %v253 = vmul.f32 %v195, %v237
  %v254 = vmul.f32 %v200, %v238
  %v255 = vmul.f32 %v205, %v239
  %v256 = vmul.f32 %v210, %v240
  %v257 = vmul.f32 %v215, %v241
  %v258 = vmul.f32 %v220, %v242
  %v259 = vmul.f32 %v225, %v243
  %v260 = vsel %vm34, %v244, 0.0
  %261 = vadd.xlane.f32.xlu0 %v260
  %v262 = vpop.xlane.xlu0 %261
  %v263 = vsel %vm34, %v245, 0.0
  %264 = vadd.xlane.f32.xlu0 %v263
  %v265 = vpop.xlane.xlu0 %264
  %v266 = vsel %vm34, %v246, 0.0
  %267 = vadd.xlane.f32.xlu0 %v266
  %v268 = vpop.xlane.xlu0 %267
  %v269 = vsel %vm34, %v247, 0.0
  %270 = vadd.xlane.f32.xlu0 %v269
  %v271 = vpop.xlane.xlu0 %270
  %v272 = vsel %vm34, %v248, 0.0
  %273 = vadd.xlane.f32.xlu0 %v272
  %v274 = vpop.xlane.xlu0 %273
  %v275 = vsel %vm34, %v249, 0.0
  %276 = vadd.xlane.f32.xlu0 %v275
  %v277 = vpop.xlane.xlu0 %276
  %v278 = vsel %vm34, %v250, 0.0
  %279 = vadd.xlane.f32.xlu0 %v278
  %v280 = vpop.xlane.xlu0 %279
  %v281 = vsel %vm34, %v251, 0.0
  %282 = vadd.xlane.f32.xlu0 %v281
  %v283 = vpop.xlane.xlu0 %282
  %v284 = vsel %vm34, %v252, 0.0
  %285 = vadd.xlane.f32.xlu0 %v284
  %v286 = vpop.xlane.xlu0 %285
  %v287 = vsel %vm34, %v253, 0.0
  %288 = vadd.xlane.f32.xlu0 %v287
  %v289 = vpop.xlane.xlu0 %288
  %v290 = vsel %vm34, %v254, 0.0
  %291 = vadd.xlane.f32.xlu0 %v290
  %v292 = vpop.xlane.xlu0 %291
  %v293 = vsel %vm34, %v255, 0.0
  %294 = vadd.xlane.f32.xlu0 %v293
  %v295 = vpop.xlane.xlu0 %294
  %v296 = vsel %vm34, %v256, 0.0
  %297 = vadd.xlane.f32.xlu0 %v296
  %v298 = vpop.xlane.xlu0 %297
  %v299 = vsel %vm34, %v257, 0.0
  %300 = vadd.xlane.f32.xlu0 %v299
  %v301 = vpop.xlane.xlu0 %300
  %v302 = vsel %vm34, %v258, 0.0
  %303 = vadd.xlane.f32.xlu0 %v302
  %v304 = vpop.xlane.xlu0 %303
  %v305 = vsel %vm34, %v259, 0.0
  %306 = vadd.xlane.f32.xlu0 %v305
  %v307 = vpop.xlane.xlu0 %306
  %v324 = vlaneseq
  %v325 = vand.u32 %v324, 127
  %v326 = vlaneseq
  %v327 = vshrl.u32 %v326, 7
  %v328 = vsub.s32 %v325, %v327
  %v329 = vrot.slane %v262, %v328
  %v330 = vadd.s32 %v325, 4294967288
  %v331 = vlaneseq
  %v332 = vshrl.u32 %v331, 7
  %v333 = vsub.s32 %v330, %v332
  %v334 = vrot.slane %v265, %v333
  %vm335 = vcmask 130112
  %v336 = vsel %vm335, %v334, %v329
  %v337 = vadd.s32 %v325, 4294967280
  %v338 = vlaneseq
  %v339 = vshrl.u32 %v338, 7
  %v340 = vsub.s32 %v337, %v339
  %v341 = vrot.slane %v268, %v340
  %vm342 = vcmask 195712
  %v343 = vsel %vm342, %v341, %v336
  %v344 = vadd.s32 %v325, 4294967272
  %v345 = vlaneseq
  %v346 = vshrl.u32 %v345, 7
  %v347 = vsub.s32 %v344, %v346
  %v348 = vrot.slane %v271, %v347
  %vm349 = vcmask 261312
  %v350 = vsel %vm349, %v348, %v343
  %v351 = vadd.s32 %v325, 4294967264
  %v352 = vlaneseq
  %v353 = vshrl.u32 %v352, 7
  %v354 = vsub.s32 %v351, %v353
  %v355 = vrot.slane %v274, %v354
  %vm356 = vcmask 326912
  %v357 = vsel %vm356, %v355, %v350
  %v358 = vadd.s32 %v325, 4294967256
  %v359 = vlaneseq
  %v360 = vshrl.u32 %v359, 7
  %v361 = vsub.s32 %v358, %v360
  %v362 = vrot.slane %v277, %v361
  %vm363 = vcmask 392512
  %v364 = vsel %vm363, %v362, %v357
  %v365 = vadd.s32 %v325, 4294967248
  %v366 = vlaneseq
  %v367 = vshrl.u32 %v366, 7
  %v368 = vsub.s32 %v365, %v367
  %v369 = vrot.slane %v280, %v368
  %vm370 = vcmask 458112
  %v371 = vsel %vm370, %v369, %v364
  %v372 = vadd.s32 %v325, 4294967240
  %v373 = vlaneseq
  %v374 = vshrl.u32 %v373, 7
  %v375 = vsub.s32 %v372, %v374
  %v376 = vrot.slane %v283, %v375
  %vm377 = vcmask 523712
  %v378 = vsel %vm377, %v376, %v371
  %v379 = vadd.s32 %v325, 4294967232
  %v380 = vlaneseq
  %v381 = vshrl.u32 %v380, 7
  %v382 = vsub.s32 %v379, %v381
  %v383 = vrot.slane %v286, %v382
  %vm384 = vcmask 589312
  %v385 = vsel %vm384, %v383, %v378
  %v386 = vadd.s32 %v325, 4294967224
  %v387 = vlaneseq
  %v388 = vshrl.u32 %v387, 7
  %v389 = vsub.s32 %v386, %v388
  %v390 = vrot.slane %v289, %v389
  %vm391 = vcmask 654912
  %v392 = vsel %vm391, %v390, %v385
  %v393 = vadd.s32 %v325, 4294967216
  %v394 = vlaneseq
  %v395 = vshrl.u32 %v394, 7
  %v396 = vsub.s32 %v393, %v395
  %v397 = vrot.slane %v292, %v396
  %vm398 = vcmask 720512
  %v399 = vsel %vm398, %v397, %v392
  %v400 = vadd.s32 %v325, 4294967208
  %v401 = vlaneseq
  %v402 = vshrl.u32 %v401, 7
  %v403 = vsub.s32 %v400, %v402
  %v404 = vrot.slane %v295, %v403
  %vm405 = vcmask 786112
  %v406 = vsel %vm405, %v404, %v399
  %v407 = vadd.s32 %v325, 4294967200
  %v408 = vlaneseq
  %v409 = vshrl.u32 %v408, 7
  %v410 = vsub.s32 %v407, %v409
  %v411 = vrot.slane %v298, %v410
  %vm412 = vcmask 851712
  %v413 = vsel %vm412, %v411, %v406
  %v414 = vadd.s32 %v325, 4294967192
  %v415 = vlaneseq
  %v416 = vshrl.u32 %v415, 7
  %v417 = vsub.s32 %v414, %v416
  %v418 = vrot.slane %v301, %v417
  %vm419 = vcmask 917312
  %v420 = vsel %vm419, %v418, %v413
  %v421 = vadd.s32 %v325, 4294967184
  %v422 = vlaneseq
  %v423 = vshrl.u32 %v422, 7
  %v424 = vsub.s32 %v421, %v423
  %v425 = vrot.slane %v304, %v424
  %vm426 = vcmask 982912
  %v427 = vsel %vm426, %v425, %v420
  %v428 = vadd.s32 %v325, 4294967176
  %v429 = vlaneseq
  %v430 = vshrl.u32 %v429, 7
  %v431 = vsub.s32 %v428, %v430
  %v432 = vrot.slane %v307, %v431
  %vm433 = vcmask 1048512
  %v434 = vsel %vm433, %v432, %v427
  %436 = vst [vmem:[%s3] sm:$0x1] %v434
  // Predicated region
  $region14: #{decagon_decoder_forward.5} parent=0 // pred_check
    _
  $region15: #{decagon_decoder_forward.5} parent=0 // pred_check_branch
    %438 = sbr.rel (0) target = $region17
  $region16: #{decagon_decoder_forward.5} parent=0 // pred_region
    _
  $region17: #{decagon_decoder_forward.5} parent=0 // pred_fallthru
    _
  // Predicated region
  $region18: #{decagon_decoder_forward.5} parent=0 // pred_check
    _
  $region19: #{decagon_decoder_forward.5} parent=0 // pred_check_branch
    %440 = sbr.rel (0) target = $region21
  $region20: #{decagon_decoder_forward.5} parent=0 // pred_region
    _
  $region21: #{decagon_decoder_forward.5} parent=0 // pred_fallthru
    _

// kernel: decagon_decoder_forward.3
$region0: #{decagon_decoder_forward.3}
  #allocation0 [shape = 'u32[]', space=smem, size = 0x4, offset = 0x4, fixed_abs, tag = 'smem constant byte address 0x4 - core index']
  #allocation1 [shape = 'u32[144,128]{1,0:T(1,128)}', space=vmem, size = 0x12000, scoped, tag = 'internal scratch']
  %s0 = inlined_call_operand.vmem [shape: f32[384,16], index: 0, kind: input, shape index: {}]
  %s1 = inlined_call_operand.vmem [shape: f32[384,16], index: 1, kind: input, shape index: {}]
  %s2 = inlined_call_operand.vmem [shape: f32[16,16], index: 2, kind: input, shape index: {}]
  %s3 = inlined_call_operand.vmem [shape: f32[1,384], index: 3, kind: output, shape index: {}]
  %s4 = sld [smem:[#allocation0]]
  $region45: #{decagon_decoder_forward.3} parent=0
    _
  %s6 = ssub.s32 1, %s4
  %s7 = scalar_select 0, %s6, %s4
  loop: start=0, step=1, limit=5
  $region2: #{decagon_decoder_forward.3} parent=0 // loop_pre_header
    _
  $region3: #{decagon_decoder_forward.3} parent=0 // loop_header
    %s9 = sphi 0, %s13
    %p10 = scmp.ge.s32.totalorder %s9, 5
    %s19 = sphi 0, %s21
    %s22 = sphi 0, %s19
    %s23 = sphi 0, %s22
    %s39 = sphi 0, %s23
    %s45 = sphi 0, %s47
    %s48 = sphi 0, %s45
    %s49 = sphi 0, %s48
    %s65 = sphi 0, %s49
    %s69 = sphi 0, %s69
    %s71 = sphi 0, %s69
    %s72 = sphi 0, %s71
    %s86 = sphi 0, %s72
    %s92 = sphi 0, %s94
    %s95 = sphi 0, %s92
    %s96 = sphi 0, %s95
    %s112 = sphi 0, %s96
  $region4: #{decagon_decoder_forward.3} parent=0 // loop_header_branch
    %12 = sbr.rel (%p10) target = $region8
  $region5: #{decagon_decoder_forward.3} parent=0 // loop_body
    %s14 = ssub.s32 %s9, 1
    %s15 = ssub.s32 %s9, 2
    %s16 = sadd.s32 %s9, 1
    %s17 = ssub.s32 %s9, %s16
    %p18 = scmp.eq.s32.totalorder %s17, 0
    %s20 = sadd.s32 %s19, 1
    %s21 = scalar_select %p18, %s19, %s20
    %p24 = pneg %p18
    %p25 = scmp.eq.s32.totalorder %s9, 2
    %p26 = por %p24, %p25
    %p27 = scmp.ne.s32.totalorder %s19, %s22
    %p28 = scmp.eq.s32.totalorder %s9, 0
    %p29 = por %p27, %p28
    %p30 = scmp.ne.s32.totalorder %s19, %s22
    %p31 = scmp.eq.s32.totalorder %s14, 2
    %p32 = por %p30, %p31
    %p33 = scmp.ne.s32.totalorder %s22, %s23
    %p34 = scmp.eq.s32.totalorder %s14, 0
    %p35 = por %p33, %p34
    %p36 = scmp.ne.s32.totalorder %s22, %s23
    %p37 = scmp.eq.s32.totalorder %s15, 2
    %p38 = por %p36, %p37
    %p40 = scmp.ne.s32.totalorder %s23, %s39
    %p41 = scmp.eq.s32.totalorder %s15, 0
    %p42 = por %p40, %p41
    %s43 = ssub.s32 %s9, %s16
    %p44 = scmp.eq.s32.totalorder %s43, 0
    %s46 = sadd.s32 %s45, 1
    %s47 = scalar_select %p44, %s45, %s46
    %p50 = pneg %p44
    %p51 = scmp.eq.s32.totalorder %s9, 2
    %p52 = por %p50, %p51
    %p53 = scmp.ne.s32.totalorder %s45, %s48
    %p54 = scmp.eq.s32.totalorder %s9, 0
    %p55 = por %p53, %p54
    %p56 = scmp.ne.s32.totalorder %s45, %s48
    %p57 = scmp.eq.s32.totalorder %s14, 2
    %p58 = por %p56, %p57
    %p59 = scmp.ne.s32.totalorder %s48, %s49
    %p60 = scmp.eq.s32.totalorder %s14, 0
    %p61 = por %p59, %p60
    %p62 = scmp.ne.s32.totalorder %s48, %s49
    %p63 = scmp.eq.s32.totalorder %s15, 2
    %p64 = por %p62, %p63
    %p66 = scmp.ne.s32.totalorder %s49, %s65
    %p67 = scmp.eq.s32.totalorder %s15, 0
    %p68 = por %p66, %p67
    %s70 = sadd.s32 %s69, 1
    %p73 = scmp.eq.s32.totalorder %s9, 2
    %p74 = scmp.ne.s32.totalorder %s69, %s71
    %p75 = scmp.eq.s32.totalorder %s9, 0
    %p76 = por %p74, %p75
    %p77 = scmp.ne.s32.totalorder %s69, %s71
    %p78 = scmp.eq.s32.totalorder %s14, 2
    %p79 = por %p77, %p78
    %p80 = scmp.ne.s32.totalorder %s71, %s72
    %p81 = scmp.eq.s32.totalorder %s14, 0
    %p82 = por %p80, %p81
    %p83 = scmp.ne.s32.totalorder %s71, %s72
    %p84 = scmp.eq.s32.totalorder %s15, 2
    %p85 = por %p83, %p84
    %p87 = scmp.ne.s32.totalorder %s72, %s86
    %p88 = scmp.eq.s32.totalorder %s15, 0
    %p89 = por %p87, %p88
    %s90 = ssub.s32 %s9, %s16
    %p91 = scmp.eq.s32.totalorder %s90, 0
    %s93 = sadd.s32 %s92, 1
    %s94 = scalar_select %p91, %s92, %s93
    %p97 = pneg %p91
    %p98 = scmp.eq.s32.totalorder %s9, 2
    %p99 = por %p97, %p98
    %p100 = scmp.ne.s32.totalorder %s92, %s95
    %p101 = scmp.eq.s32.totalorder %s9, 0
    %p102 = por %p100, %p101
    %p103 = scmp.ne.s32.totalorder %s92, %s95
    %p104 = scmp.eq.s32.totalorder %s14, 2
    %p105 = por %p103, %p104
    %p106 = scmp.ne.s32.totalorder %s95, %s96
    %p107 = scmp.eq.s32.totalorder %s14, 0
    %p108 = por %p106, %p107
    %p109 = scmp.ne.s32.totalorder %s95, %s96
    %p110 = scmp.eq.s32.totalorder %s15, 2
    %p111 = por %p109, %p110
    %p113 = scmp.ne.s32.totalorder %s96, %s112
    %p114 = scmp.eq.s32.totalorder %s15, 0
    %p115 = por %p113, %p114
    %p116 = scmp.le.s32.totalorder 1, %s9
    %p117 = scmp.lt.s32.totalorder %s9, 4
    %p118 = pnand %p116, %p117
    %p119 = pneg %p118
    // Predicated region
    $region9: #{decagon_decoder_forward.3} parent=5 // pred_check
      _
    $region10: #{decagon_decoder_forward.3} parent=5 // pred_check_branch
      %121 = sbr.rel (%p118) target = $region12
    $region11: #{decagon_decoder_forward.3} parent=5 // pred_region
      %s122 = ssub.s32 %s9, 1
      // Predicated region
      $region13: #{decagon_decoder_forward.3} parent=11 // pred_check
        %p123 = pneg %p82
      $region14: #{decagon_decoder_forward.3} parent=11 // pred_check_branch
        %125 = sbr.rel (%p123) target = $region16
      $region15: #{decagon_decoder_forward.3} parent=11 // pred_region
        _
      $region16: #{decagon_decoder_forward.3} parent=11 // pred_fallthru
        _
    $region12: #{decagon_decoder_forward.3} parent=5 // pred_fallthru
      _
    %p126 = scmp.lt.s32.totalorder %s9, 3
    // Predicated region
    $region17: #{decagon_decoder_forward.3} parent=5 // pred_check
      %p127 = pneg %p126
    $region18: #{decagon_decoder_forward.3} parent=5 // pred_check_branch
      %129 = sbr.rel (%p127) target = $region20
    $region19: #{decagon_decoder_forward.3} parent=5 // pred_region
      // Predicated region
      $region21: #{decagon_decoder_forward.3} parent=19 // pred_check
        %p130 = pneg %p29
      $region22: #{decagon_decoder_forward.3} parent=19 // pred_check_branch
        %132 = sbr.rel (%p130) target = $region24
      $region23: #{decagon_decoder_forward.3} parent=19 // pred_region
        %s133 = smul.u32 16, %s9
        %p134 = scmp.lt.s32.totalorder %s133, 47
        %s135 = scalar_select %p134, %s133, 47
        %s136 = smul.addr %s135, 8
        %s137 = scalar_lea.vmem %s0, %s136
        %s138 = smul.u32 16, %s9
      $region24: #{decagon_decoder_forward.3} parent=19 // pred_fallthru
        _
      // Predicated region
      $region25: #{decagon_decoder_forward.3} parent=19 // pred_check
        %p139 = pneg %p55
      $region26: #{decagon_decoder_forward.3} parent=19 // pred_check_branch
        %141 = sbr.rel (%p139) target = $region28
      $region27: #{decagon_decoder_forward.3} parent=19 // pred_region
        %s142 = smul.u32 16, %s9
        %p143 = scmp.lt.s32.totalorder %s142, 47
        %s144 = scalar_select %p143, %s142, 47
        %s145 = smul.addr %s144, 8
        %s146 = scalar_lea.vmem %s1, %s145
        %s147 = smul.u32 16, %s9
      $region28: #{decagon_decoder_forward.3} parent=19 // pred_fallthru
        _
    $region20: #{decagon_decoder_forward.3} parent=5 // pred_fallthru
      _
    %p148 = scmp.le.s32.totalorder 1, %s9
    %p149 = scmp.lt.s32.totalorder %s9, 4
    %p150 = pnand %p148, %p149
    %p151 = pneg %p150
    // Predicated region
    $region29: #{decagon_decoder_forward.3} parent=5 // pred_check
      _
    $region30: #{decagon_decoder_forward.3} parent=5 // pred_check_branch
      %153 = sbr.rel (%p150) target = $region32
    $region31: #{decagon_decoder_forward.3} parent=5 // pred_region
      %s154 = ssub.s32 %s9, 1
      %s155 = smul.u32 16, %s14
      %p156 = scmp.lt.s32.totalorder %s155, 47
      %s157 = scalar_select %p156, %s155, 47
      %s158 = smul.addr %s157, 8
      %s159 = scalar_lea.vmem %s0, %s158
      %p160 = pneg %p35
      %p161 = pneg %p32
      %s162 = smul.u32 16, %s14
      %p163 = scmp.lt.s32.totalorder %s162, 47
      %s164 = scalar_select %p163, %s162, 47
      %s165 = smul.addr %s164, 8
      %s166 = scalar_lea.vmem %s1, %s165
      %p167 = pneg %p61
      %p168 = pneg %p58
      %p169 = pneg %p82
      %p170 = pneg %p79
      %p171 = pneg %p108
      %p172 = pneg %p105
      %p173 = scmp.lt.s32.totalorder %s14, 2
      %s174 = scalar_select %p173, %s14, 2
      %s175 = scalar_lea.vmem %s3, %s174
      %s176 = smul.u32 16, %s14
      %p177 = scmp.lt.s32.totalorder %s176, 47
      %s178 = scalar_select %p177, %s176, 47
      %s179 = smul.addr %s178, 8
      %s180 = scalar_lea.vmem %s0, %s179
      %s181 = smul.u32 16, %s14
      %s182 = smul.u32 16, %s14
      %p183 = scmp.lt.s32.totalorder %s182, 47
      %s184 = scalar_select %p183, %s182, 47
      %s185 = smul.addr %s184, 8
      %s186 = scalar_lea.vmem %s1, %s185
      %s187 = smul.u32 16, %s14
      %p188 = scmp.lt.s32.totalorder %s14, 2
      %s189 = scalar_select %p188, %s14, 2
      %s190 = scalar_lea.vmem %s3, %s189
      %v191 = vld [vmem:[%s180] sm:$0xff]
      %v192 = vld [vmem:[%s180 + $0x8] sm:$0xff]
      %v193 = vld [vmem:[%s180 + $0x10] sm:$0xff]
      %v194 = vld [vmem:[%s180 + $0x18] sm:$0xff]
      %v195 = vld [vmem:[%s180 + $0x20] sm:$0xff]
      %v196 = vld [vmem:[%s180 + $0x28] sm:$0xff]
      %v197 = vld [vmem:[%s180 + $0x30] sm:$0xff]
      %v198 = vld [vmem:[%s180 + $0x38] sm:$0xff]
      %v199 = vld [vmem:[%s180 + $0x40] sm:$0xff]
      %v200 = vld [vmem:[%s180 + $0x48] sm:$0xff]
      %v201 = vld [vmem:[%s180 + $0x50] sm:$0xff]
      %v202 = vld [vmem:[%s180 + $0x58] sm:$0xff]
      %v203 = vld [vmem:[%s180 + $0x60] sm:$0xff]
      %v204 = vld [vmem:[%s180 + $0x68] sm:$0xff]
      %v205 = vld [vmem:[%s180 + $0x70] sm:$0xff]
      %v206 = vld [vmem:[%s180 + $0x78] sm:$0xff]
      %v207 = vld [vmem:[%s2] sm:$0xff]
      %v208 = vld [vmem:[%s2 + $0x8] sm:$0xff]
      %vm209 = vcmask 130048
      %v211 = vsel %vm209, %v191, 0
      %v214 = vsel %vm209, %v192, 0
      %v217 = vsel %vm209, %v193, 0
      %v220 = vsel %vm209, %v194, 0
      %v223 = vsel %vm209, %v195, 0
      %v226 = vsel %vm209, %v196, 0
      %v229 = vsel %vm209, %v197, 0
      %v232 = vsel %vm209, %v198, 0
      %v235 = vsel %vm209, %v199, 0
      %v238 = vsel %vm209, %v200, 0
      %v241 = vsel %vm209, %v201, 0
      %v244 = vsel %vm209, %v202, 0
      %v247 = vsel %vm209, %v203, 0
      %v250 = vsel %vm209, %v204, 0
      %v253 = vsel %vm209, %v205, 0
      %v256 = vsel %vm209, %v206, 0
      %258 = vmatprep.subr.mxu0 0.0
      %259 = vmatpush1.msra.mxu0 %v207
      %260 = vmatprep.subr.mxu0 0.0
      %261 = vmatpush1.msra.mxu0 %v208
      %262 = vmatprep.subr.mxu0 0.0
      %263 = vmatpush1.msra.mxu0 0.0
      %264 = vmatprep.subr.mxu0 0.0
      %265 = vmatpush1.msra.mxu0 0.0
      %266 = vmatprep.subr.mxu0 0.0
      %267 = vmatpush1.msra.mxu0 0.0
      %268 = vmatprep.subr.mxu0 0.0
      %269 = vmatpush1.msra.mxu0 0.0
      %270 = vmatprep.subr.mxu0 0.0
      %271 = vmatpush1.msra.mxu0 0.0
      %272 = vmatprep.subr.mxu0 0.0
      %273 = vmatpush1.msra.mxu0 0.0
      %274 = vmatprep.subr.mxu0 0.0
      %275 = vmatpush1.msra.mxu0 0.0
      %276 = vmatprep.subr.mxu0 0.0
      %277 = vmatpush1.msra.mxu0 0.0
      %278 = vmatprep.subr.mxu0 0.0
      %279 = vmatpush1.msra.mxu0 0.0
      %280 = vmatprep.subr.mxu0 0.0
      %281 = vmatpush1.msra.mxu0 0.0
      %282 = vmatprep.subr.mxu0 0.0
      %283 = vmatpush1.msra.mxu0 0.0
      %284 = vmatprep.subr.mxu0 0.0
      %285 = vmatpush1.msra.mxu0 0.0
      %286 = vmatprep.subr.mxu0 0.0
      %287 = vmatpush1.msra.mxu0 0.0
      %288 = vmatprep.subr.mxu0 0.0
      %289 = vmatpush1.msra.mxu0 0.0
      %290 = vmatprep.subr.mxu0 0.0
      %291 = vmatpush1.msra.mxu0 0.0
      %292 = vmatprep.subr.mxu0 0.0
      %293 = vmatpush1.msra.mxu0 0.0
      %294 = vmatprep.subr.mxu0 0.0
      %295 = vmatpush1.msra.mxu0 0.0
      %296 = vmatprep.subr.mxu0 0.0
      %297 = vmatpush1.msra.mxu0 0.0
      %298 = vmatprep.subr.mxu0 0.0
      %299 = vmatpush1.msra.mxu0 0.0
      %300 = vmatprep.subr.mxu0 0.0
      %301 = vmatpush1.msra.mxu0 0.0
      %302 = vmatprep.subr.mxu0 0.0
      %303 = vmatpush1.msra.mxu0 0.0
      %304 = vmatprep.subr.mxu0 0.0
      %305 = vmatpush1.msra.mxu0 0.0
      %306 = vmatprep.subr.mxu0 0.0
      %307 = vmatpush1.msra.mxu0 0.0
      %308 = vmatprep.subr.mxu0 0.0
      %309 = vmatpush1.msra.mxu0 0.0
      %310 = vmatprep.subr.mxu0 0.0
      %311 = vmatpush1.msra.mxu0 0.0
      %312 = vmatprep.subr.mxu0 0.0
      %313 = vmatpush1.msra.mxu0 0.0
      %314 = vmatprep.subr.mxu0 0.0
      %315 = vmatpush1.msra.mxu0 0.0
      %316 = vmatprep.subr.mxu0 0.0
      %317 = vmatpush1.msra.mxu0 0.0
      %318 = vmatprep.subr.mxu0 0.0
      %319 = vmatpush1.msra.mxu0 0.0
      %320 = vmatprep.subr.mxu0 0.0
      %321 = vmatpush1.msra.mxu0 0.0
      %322 = vmatprep.mubr.f32.mxu0 0.0
      %323 = vmatmul.mubr.f32.gmra.mrb[0].mxu0 %v211
      %v324 = vpop.f32.mrb[0].mxu0
      %v325 = vadd.f32 0.0, %v324
      %v326 = vpop.f32.mrb[0].mxu0
      %327 = vmatprep.mubr.f32.mxu0 0.0
      %328 = vmatmul.mubr.f32.gmra.mrb[0].mxu0 %v214
      %v329 = vpop.f32.mrb[0].mxu0
      %v330 = vadd.f32 0.0, %v329
      %v331 = vpop.f32.mrb[0].mxu0
      %332 = vmatprep.mubr.f32.mxu0 0.0
      %333 = vmatmul.mubr.f32.gmra.mrb[0].mxu0 %v217
      %v334 = vpop.f32.mrb[0].mxu0
      %v335 = vadd.f32 0.0, %v334
      %v336 = vpop.f32.mrb[0].mxu0
      %337 = vmatprep.mubr.f32.mxu0 0.0
      %338 = vmatmul.mubr.f32.gmra.mrb[0].mxu0 %v220
      %v339 = vpop.f32.mrb[0].mxu0
      %v340 = vadd.f32 0.0, %v339
      %v341 = vpop.f32.mrb[0].mxu0
      %342 = vmatprep.mubr.f32.mxu0 0.0
      %343 = vmatmul.mubr.f32.gmra.mrb[0].mxu0 %v223
      %v344 = vpop.f32.mrb[0].mxu0
      %v345 = vadd.f32 0.0, %v344
      %v346 = vpop.f32.mrb[0].mxu0
      %347 = vmatprep.mubr.f32.mxu0 0.0
      %348 = vmatmul.mubr.f32.gmra.mrb[0].mxu0 %v226
      %v349 = vpop.f32.mrb[0].mxu0
      %v350 = vadd.f32 0.0, %v349
      %v351 = vpop.f32.mrb[0].mxu0
      %352 = vmatprep.mubr.f32.mxu0 0.0
      %353 = vmatmul.mubr.f32.gmra.mrb[0].mxu0 %v229
      %v354 = vpop.f32.mrb[0].mxu0
      %v355 = vadd.f32 0.0, %v354
      %v356 = vpop.f32.mrb[0].mxu0
      %357 = vmatprep.mubr.f32.mxu0 0.0
      %358 = vmatmul.mubr.f32.gmra.mrb[0].mxu0 %v232
      %v359 = vpop.f32.mrb[0].mxu0
      %v360 = vadd.f32 0.0, %v359
      %v361 = vpop.f32.mrb[0].mxu0
      %362 = vmatprep.mubr.f32.mxu0 0.0
      %363 = vmatmul.mubr.f32.gmra.mrb[0].mxu0 %v235
      %v364 = vpop.f32.mrb[0].mxu0
      %v365 = vadd.f32 0.0, %v364
      %v366 = vpop.f32.mrb[0].mxu0
      %367 = vmatprep.mubr.f32.mxu0 0.0
      %368 = vmatmul.mubr.f32.gmra.mrb[0].mxu0 %v238
      %v369 = vpop.f32.mrb[0].mxu0
      %v370 = vadd.f32 0.0, %v369
      %v371 = vpop.f32.mrb[0].mxu0
      %372 = vmatprep.mubr.f32.mxu0 0.0
      %373 = vmatmul.mubr.f32.gmra.mrb[0].mxu0 %v241
      %v374 = vpop.f32.mrb[0].mxu0
      %v375 = vadd.f32 0.0, %v374
      %v376 = vpop.f32.mrb[0].mxu0
      %377 = vmatprep.mubr.f32.mxu0 0.0
      %378 = vmatmul.mubr.f32.gmra.mrb[0].mxu0 %v244
      %v379 = vpop.f32.mrb[0].mxu0
      %v380 = vadd.f32 0.0, %v379
      %v381 = vpop.f32.mrb[0].mxu0
      %382 = vmatprep.mubr.f32.mxu0 0.0
      %383 = vmatmul.mubr.f32.gmra.mrb[0].mxu0 %v247
      %v384 = vpop.f32.mrb[0].mxu0
      %v385 = vadd.f32 0.0, %v384
      %v386 = vpop.f32.mrb[0].mxu0
      %387 = vmatprep.mubr.f32.mxu0 0.0
      %388 = vmatmul.mubr.f32.gmra.mrb[0].mxu0 %v250
      %v389 = vpop.f32.mrb[0].mxu0
      %v390 = vadd.f32 0.0, %v389
      %v391 = vpop.f32.mrb[0].mxu0
      %392 = vmatprep.mubr.f32.mxu0 0.0
      %393 = vmatmul.mubr.f32.gmra.mrb[0].mxu0 %v253
      %v394 = vpop.f32.mrb[0].mxu0
      %v395 = vadd.f32 0.0, %v394
      %v396 = vpop.f32.mrb[0].mxu0
      %397 = vmatprep.mubr.f32.mxu0 0.0
      %398 = vmatmul.mubr.f32.gmra.mrb[0].mxu0 %v256
      %v399 = vpop.f32.mrb[0].mxu0
      %v400 = vadd.f32 0.0, %v399
      %v401 = vpop.f32.mrb[0].mxu0
      %402 = vdwg.mxu0
      %v403 = vld [vmem:[%s186] sm:$0xff]
      %v404 = vld [vmem:[%s186 + $0x8] sm:$0xff]
      %v405 = vld [vmem:[%s186 + $0x10] sm:$0xff]
      %v406 = vld [vmem:[%s186 + $0x18] sm:$0xff]
      %v407 = vld [vmem:[%s186 + $0x20] sm:$0xff]
      %v408 = vld [vmem:[%s186 + $0x28] sm:$0xff]
      %v409 = vld [vmem:[%s186 + $0x30] sm:$0xff]
      %v410 = vld [vmem:[%s186 + $0x38] sm:$0xff]
      %v411 = vld [vmem:[%s186 + $0x40] sm:$0xff]
      %v412 = vld [vmem:[%s186 + $0x48] sm:$0xff]
      %v413 = vld [vmem:[%s186 + $0x50] sm:$0xff]
      %v414 = vld [vmem:[%s186 + $0x58] sm:$0xff]
      %v415 = vld [vmem:[%s186 + $0x60] sm:$0xff]
      %v416 = vld [vmem:[%s186 + $0x68] sm:$0xff]
      %v417 = vld [vmem:[%s186 + $0x70] sm:$0xff]
      %v418 = vld [vmem:[%s186 + $0x78] sm:$0xff]
      %v419 = vmul.f32 %v325, %v403
      %v420 = vmul.f32 %v330, %v404
      %v421 = vmul.f32 %v335, %v405
      %v422 = vmul.f32 %v340, %v406
      %v423 = vmul.f32 %v345, %v407
      %v424 = vmul.f32 %v350, %v408
      %v425 = vmul.f32 %v355, %v409
      %v426 = vmul.f32 %v360, %v410
      %v427 = vmul.f32 %v365, %v411
      %v428 = vmul.f32 %v370, %v412
      %v429 = vmul.f32 %v375, %v413
      %v430 = vmul.f32 %v380, %v414
      %v431 = vmul.f32 %v385, %v415
      %v432 = vmul.f32 %v390, %v416
      %v433 = vmul.f32 %v395, %v417
      %v434 = vmul.f32 %v400, %v418
      %v435 = vsel %vm209, %v419, 0.0
      %436 = vadd.xlane.f32.xlu0 %v435
      %v437 = vpop.xlane.xlu0 %436
      %v438 = vsel %vm209, %v420, 0.0
      %439 = vadd.xlane.f32.xlu0 %v438
      %v440 = vpop.xlane.xlu0 %439
      %v441 = vsel %vm209, %v421, 0.0
      %442 = vadd.xlane.f32.xlu0 %v441
      %v443 = vpop.xlane.xlu0 %442
      %v444 = vsel %vm209, %v422, 0.0
      %445 = vadd.xlane.f32.xlu0 %v444
      %v446 = vpop.xlane.xlu0 %445
      %v447 = vsel %vm209, %v423, 0.0
      %448 = vadd.xlane.f32.xlu0 %v447
      %v449 = vpop.xlane.xlu0 %448
      %v450 = vsel %vm209, %v424, 0.0
      %451 = vadd.xlane.f32.xlu0 %v450
      %v452 = vpop.xlane.xlu0 %451
      %v453 = vsel %vm209, %v425, 0.0
      %454 = vadd.xlane.f32.xlu0 %v453
      %v455 = vpop.xlane.xlu0 %454
      %v456 = vsel %vm209, %v426, 0.0
      %457 = vadd.xlane.f32.xlu0 %v456
      %v458 = vpop.xlane.xlu0 %457
      %v459 = vsel %vm209, %v427, 0.0
      %460 = vadd.xlane.f32.xlu0 %v459
      %v461 = vpop.xlane.xlu0 %460
      %v462 = vsel %vm209, %v428, 0.0
      %463 = vadd.xlane.f32.xlu0 %v462
      %v464 = vpop.xlane.xlu0 %463
      %v465 = vsel %vm209, %v429, 0.0
      %466 = vadd.xlane.f32.xlu0 %v465
      %v467 = vpop.xlane.xlu0 %466
      %v468 = vsel %vm209, %v430, 0.0
      %469 = vadd.xlane.f32.xlu0 %v468
      %v470 = vpop.xlane.xlu0 %469
      %v471 = vsel %vm209, %v431, 0.0
      %472 = vadd.xlane.f32.xlu0 %v471
      %v473 = vpop.xlane.xlu0 %472
      %v474 = vsel %vm209, %v432, 0.0
      %475 = vadd.xlane.f32.xlu0 %v474
      %v476 = vpop.xlane.xlu0 %475
      %v477 = vsel %vm209, %v433, 0.0
      %478 = vadd.xlane.f32.xlu0 %v477
      %v479 = vpop.xlane.xlu0 %478
      %v480 = vsel %vm209, %v434, 0.0
      %481 = vadd.xlane.f32.xlu0 %v480
      %v482 = vpop.xlane.xlu0 %481
      %v499 = vlaneseq
      %v500 = vand.u32 %v499, 127
      %v501 = vlaneseq
      %v502 = vshrl.u32 %v501, 7
      %v503 = vsub.s32 %v500, %v502
      %v504 = vrot.slane %v437, %v503
      %v505 = vadd.s32 %v500, 4294967288
      %v506 = vlaneseq
      %v507 = vshrl.u32 %v506, 7
      %v508 = vsub.s32 %v505, %v507
      %v509 = vrot.slane %v440, %v508
      %vm510 = vcmask 130112
      %v511 = vsel %vm510, %v509, %v504
      %v512 = vadd.s32 %v500, 4294967280
      %v513 = vlaneseq
      %v514 = vshrl.u32 %v513, 7
      %v515 = vsub.s32 %v512, %v514
      %v516 = vrot.slane %v443, %v515
      %vm517 = vcmask 195712
      %v518 = vsel %vm517, %v516, %v511
      %v519 = vadd.s32 %v500, 4294967272
      %v520 = vlaneseq
      %v521 = vshrl.u32 %v520, 7
      %v522 = vsub.s32 %v519, %v521
      %v523 = vrot.slane %v446, %v522
      %vm524 = vcmask 261312
      %v525 = vsel %vm524, %v523, %v518
      %v526 = vadd.s32 %v500, 4294967264
      %v527 = vlaneseq
      %v528 = vshrl.u32 %v527, 7
      %v529 = vsub.s32 %v526, %v528
      %v530 = vrot.slane %v449, %v529
      %vm531 = vcmask 326912
      %v532 = vsel %vm531, %v530, %v525
      %v533 = vadd.s32 %v500, 4294967256
      %v534 = vlaneseq
      %v535 = vshrl.u32 %v534, 7
      %v536 = vsub.s32 %v533, %v535
      %v537 = vrot.slane %v452, %v536
      %vm538 = vcmask 392512
      %v539 = vsel %vm538, %v537, %v532
      %v540 = vadd.s32 %v500, 4294967248
      %v541 = vlaneseq
      %v542 = vshrl.u32 %v541, 7
      %v543 = vsub.s32 %v540, %v542
      %v544 = vrot.slane %v455, %v543
      %vm545 = vcmask 458112
      %v546 = vsel %vm545, %v544, %v539
      %v547 = vadd.s32 %v500, 4294967240
      %v548 = vlaneseq
      %v549 = vshrl.u32 %v548, 7
      %v550 = vsub.s32 %v547, %v549
      %v551 = vrot.slane %v458, %v550
      %vm552 = vcmask 523712
      %v553 = vsel %vm552, %v551, %v546
      %v554 = vadd.s32 %v500, 4294967232
      %v555 = vlaneseq
      %v556 = vshrl.u32 %v555, 7
      %v557 = vsub.s32 %v554, %v556
      %v558 = vrot.slane %v461, %v557
      %vm559 = vcmask 589312
      %v560 = vsel %vm559, %v558, %v553
      %v561 = vadd.s32 %v500, 4294967224
      %v562 = vlaneseq
      %v563 = vshrl.u32 %v562, 7
      %v564 = vsub.s32 %v561, %v563
      %v565 = vrot.slane %v464, %v564
      %vm566 = vcmask 654912
      %v567 = vsel %vm566, %v565, %v560
      %v568 = vadd.s32 %v500, 4294967216
      %v569 = vlaneseq
      %v570 = vshrl.u32 %v569, 7
      %v571 = vsub.s32 %v568, %v570
      %v572 = vrot.slane %v467, %v571
      %vm573 = vcmask 720512
      %v574 = vsel %vm573, %v572, %v567
      %v575 = vadd.s32 %v500, 4294967208
      %v576 = vlaneseq
      %v577 = vshrl.u32 %v576, 7
      %v578 = vsub.s32 %v575, %v577
      %v579 = vrot.slane %v470, %v578
      %vm580 = vcmask 786112
      %v581 = vsel %vm580, %v579, %v574
      %v582 = vadd.s32 %v500, 4294967200
      %v583 = vlaneseq
      %v584 = vshrl.u32 %v583, 7
      %v585 = vsub.s32 %v582, %v584
      %v586 = vrot.slane %v473, %v585
      %vm587 = vcmask 851712
      %v588 = vsel %vm587, %v586, %v581
      %v589 = vadd.s32 %v500, 4294967192
      %v590 = vlaneseq
      %v591 = vshrl.u32 %v590, 7
      %v592 = vsub.s32 %v589, %v591
      %v593 = vrot.slane %v476, %v592
      %vm594 = vcmask 917312
      %v595 = vsel %vm594, %v593, %v588
      %v596 = vadd.s32 %v500, 4294967184
      %v597 = vlaneseq
      %v598 = vshrl.u32 %v597, 7
      %v599 = vsub.s32 %v596, %v598
      %v600 = vrot.slane %v479, %v599
      %vm601 = vcmask 982912
      %v602 = vsel %vm601, %v600, %v595
      %v603 = vadd.s32 %v500, 4294967176
      %v604 = vlaneseq
      %v605 = vshrl.u32 %v604, 7
      %v606 = vsub.s32 %v603, %v605
      %v607 = vrot.slane %v482, %v606
      %vm608 = vcmask 1048512
      %v609 = vsel %vm608, %v607, %v602
      %611 = vst [vmem:[%s190] sm:$0x1] %v609
      %p612 = scmp.lt.s32.totalorder %s14, 2
      %s613 = scalar_select %p612, %s14, 2
      %s614 = scalar_lea.vmem %s3, %s613
      // Predicated region
      $region33: #{decagon_decoder_forward.3} parent=31 // pred_check
        %p615 = pneg %p105
      $region34: #{decagon_decoder_forward.3} parent=31 // pred_check_branch
        %617 = sbr.rel (%p615) target = $region36
      $region35: #{decagon_decoder_forward.3} parent=31 // pred_region
        _
      $region36: #{decagon_decoder_forward.3} parent=31 // pred_fallthru
        _
    $region32: #{decagon_decoder_forward.3} parent=5 // pred_fallthru
      _
    %p618 = scmp.le.s32.totalorder 2, %s9
    // Predicated region
    $region37: #{decagon_decoder_forward.3} parent=5 // pred_check
      %p619 = pneg %p618
    $region38: #{decagon_decoder_forward.3} parent=5 // pred_check_branch
      %621 = sbr.rel (%p619) target = $region40
    $region39: #{decagon_decoder_forward.3} parent=5 // pred_region
      %s622 = ssub.s32 %s9, 2
      // Predicated region
      $region41: #{decagon_decoder_forward.3} parent=39 // pred_check
        %p623 = pneg %p111
      $region42: #{decagon_decoder_forward.3} parent=39 // pred_check_branch
        %625 = sbr.rel (%p623) target = $region44
      $region43: #{decagon_decoder_forward.3} parent=39 // pred_region
        %p626 = scmp.lt.s32.totalorder %s15, 2
        %s627 = scalar_select %p626, %s15, 2
        %s628 = scalar_lea.vmem %s3, %s627
      $region44: #{decagon_decoder_forward.3} parent=39 // pred_fallthru
        _
    $region40: #{decagon_decoder_forward.3} parent=5 // pred_fallthru
      _
  $region6: #{decagon_decoder_forward.3} parent=0 // loop_footer
    %s13 = sadd.s32 1, %s9
  $region7: #{decagon_decoder_forward.3} parent=0 // loop_footer_branch
    %8 = sbr.rel target = $region3
  $region8: #{decagon_decoder_forward.3} parent=0 // loop_exit
    _

</llo_original>
